<compile_context>
chip_gen: v5e
topology: v5e:2x2
jax: 0.10.0
libtpu: 0.0.40
codegen_flags: <defaults>
</compile_context>

<pallas_src>
import functools

import numpy as np
import jax
import jax.numpy as jnp
from jax import lax
from jax.experimental import pallas as pl
from jax.experimental.pallas import tpu as pltpu


def lru_kernel(x_ref, w_in_ref, b_in_ref, f_r_ref, f_i_ref,
               ln_wr_ref, ln_wi_ref, ln_br_ref, ln_bi_ref,
               w_outr_ref, w_outi_ref, b_out_ref,
               out_ref,
               vr_ref, vi_ref, gr_ref, gi_ref,
               *, TB, L, D):
    # x_ref: (M, D) bf16, time-major (row = t*TB + j), M = L*TB.

    # ---- in_proj: one MXU pass, bf16 operands, f32 accumulation ----
    u = jnp.dot(x_ref[...], w_in_ref[...],
                preferred_element_type=jnp.float32) + b_in_ref[...]
    # gamma is folded into the first 2*D output columns of w_in / b_in in the
    # wrapper, so u[:, :2D] is already the gamma-scaled recurrence input.
    vr_ref[...] = u[:, 0 * D:1 * D]          # gamma * in_real
    vi_ref[...] = u[:, 1 * D:2 * D]          # gamma * in_imag
    gr_ref[...] = u[:, 2 * D:3 * D]          # gate pre-activation (real half)
    gi_ref[...] = u[:, 3 * D:4 * D]          # gate pre-activation (imag half)

    # Hoisted (1,D) -> (TB,D) broadcasts: JAX does not CSE broadcast_in_dim,
    # so these must not live inside the unrolled loop body.
    f_r = jnp.broadcast_to(f_r_ref[...], (TB, D))
    f_i = jnp.broadcast_to(f_i_ref[...], (TB, D))

    # ---- complex linear recurrence over L, vectorized over TB batch rows ----
    # h_t = f * h_{t-1} + x_t (complex), h_{-1} = 0.  The SiLU gate is fused
    # into the step: the buffers are overwritten with the *gated* outputs
    # while the raw state is carried in registers; sigmoid (EUP) and the
    # gated stores sit off the carry's critical path.
    def body(t, carry):
        h_r, h_i = carry                     # (TB, D) each
        row = pl.multiple_of(t * TB, TB)     # aligned (TB, D) tile access
        sl = pl.ds(row, TB)
        nr = f_r * h_r - f_i * h_i + vr_ref[sl, :]
        ni = f_r * h_i + f_i * h_r + vi_ref[sl, :]
        o_r = gr_ref[sl, :]
        o_i = gi_ref[sl, :]
        vr_ref[sl, :] = nr * (o_r * jax.nn.sigmoid(o_r))
        vi_ref[sl, :] = ni * (o_i * jax.nn.sigmoid(o_i))
        return nr, ni

    zeros = jnp.zeros((TB, D), jnp.float32)
    lax.fori_loop(0, L, body, (zeros, zeros),
                  unroll=True if L <= 32 else 8)

    # ---- single-pass LayerNorm over the gated outputs y = [y_r | y_i] ----
    y_r = vr_ref[...]
    y_i = vi_ref[...]
    inv_n = 1.0 / (2.0 * D)
    s = (jnp.sum(y_r, axis=-1, keepdims=True)
         + jnp.sum(y_i, axis=-1, keepdims=True))
    ss = (jnp.sum(y_r * y_r, axis=-1, keepdims=True)
          + jnp.sum(y_i * y_i, axis=-1, keepdims=True))
    mean = s * inv_n
    var = ss * inv_n - mean * mean
    inv_std = lax.rsqrt(var + 1e-5)
    ynr = ((y_r - mean) * inv_std) * ln_wr_ref[...] + ln_br_ref[...]
    yni = ((y_i - mean) * inv_std) * ln_wi_ref[...] + ln_bi_ref[...]

    # ---- out_proj: two accumulating MXU passes (avoids a lane concatenate),
    #      bf16 operands, f32 accumulation ----
    out = (jnp.dot(ynr.astype(jnp.bfloat16), w_outr_ref[...],
                   preferred_element_type=jnp.float32)
           + jnp.dot(yni.astype(jnp.bfloat16), w_outi_ref[...],
                     preferred_element_type=jnp.float32)
           + b_out_ref[...])
    out_ref[...] = out.astype(out_ref.dtype)


def _plan(B, L, D):
    """Pick TB (batch rows per grid step) and an explicit VMEM limit.

    Per-step live set (bytes), with M = L*TB:
      x block x2 (bf16)        ~ 4*M*D
      vr/vi/gr/gi scratch f32  ~16*M*D
      u value (f32, M x 4D)    ~16*M*D
      y_n halves + bf16 casts  ~12*M*D
      out block x2 (f32)       ~ 8*M*D
    => ~56*M*D + weights.  B is assumed to already be a multiple of 8.
    """
    try:
        cap = int(pltpu.get_tpu_info().vmem_capacity_bytes)
    except Exception:
        cap = 64 << 20                      # v7x-conservative fallback
    target_ws = min(cap // 3, 48 << 20)     # leave headroom for the compiler
    weights = 4 * D * D * 2 + 2 * D * D * 2 + 16 * D * 4
    per_row = 56 * D                        # bytes per (L*TB) row

    tb = 8
    while (tb * 2 <= B and B % (tb * 2) == 0
           and (tb * 2) * L * per_row + weights <= target_ws):
        tb *= 2
    # Keep G = B/TB >= 2 when possible so the "parallel" batch axis can shard
    # across both TensorCores on v7x (neutral on single-TC v5e/v6e).
    if tb == B and B >= 16:
        tb //= 2

    ws = tb * L * per_row + weights
    vmem_limit = int(min(max(2 * ws, 32 << 20), (cap * 3) // 4))
    return tb, vmem_limit


@jax.jit
def lru_layer(x, params):
    B0, L, D = x.shape
    w_in, b_in, nu_log, theta_log, gamma_log, ln_w, ln_b, w_out, b_out = params

    # Hoisted LRU coefficient transcendentals (constant across the batch).
    nu = jnp.exp(-jnp.exp(nu_log))          # (1, D)
    theta = jnp.exp(theta_log)              # (1, D)
    gamma = jnp.exp(gamma_log)              # (1, D)
    f_r = nu * jnp.cos(theta)
    f_i = nu * jnp.sin(theta)

    # Fold gamma into the recurrence-input columns of in_proj:
    # gamma * (x @ W_v + b_v) == x @ (gamma * W_v) + gamma * b_v.
    ones = jnp.ones_like(gamma)
    col_scale = jnp.concatenate([gamma, gamma, ones, ones], axis=-1)  # (1, 4D)
    w_in_s = (w_in * col_scale).astype(jnp.bfloat16)
    b_in_s = b_in * col_scale                                          # f32

    # Split per-half parameters in the wrapper (keeps kernel refs lane-dense).
    w_out_r = w_out[:D, :].astype(jnp.bfloat16)
    w_out_i = w_out[D:, :].astype(jnp.bfloat16)
    ln_wr, ln_wi = ln_w[:, :D], ln_w[:, D:]
    ln_br, ln_bi = ln_b[:, :D], ln_b[:, D:]

    # Pad batch to a multiple of 8 so every (TB, D) scan tile is
    # sublane-aligned (padded rows are computed on zeros and discarded).
    B = B0
    if B % 8:
        pad = 8 - B % 8
        x = jnp.pad(x, ((0, pad), (0, 0), (0, 0)))
        B = B + pad

    TB, vmem_limit = _plan(B, L, D)
    G = B // TB
    M = L * TB

    # Layout plumbing in the wrapper: time-major (L*TB, D) slab per grid step
    # (row = t*TB + j).  Cast to bf16 BEFORE the transpose to halve its HBM
    # traffic.
    x_blk = (x.astype(jnp.bfloat16)
              .reshape(G, TB, L, D)
              .transpose(0, 2, 1, 3)
              .reshape(G, M, D))

    kernel = functools.partial(lru_kernel, TB=TB, L=L, D=D)

    in_specs = [
        pl.BlockSpec((None, M, D), lambda g: (g, 0, 0)),   # x slab (bf16)
        pl.BlockSpec((D, 4 * D), lambda g: (0, 0)),        # w_in (bf16, gamma-folded)
        pl.BlockSpec((1, 4 * D), lambda g: (0, 0)),        # b_in (f32, gamma-folded)
        pl.BlockSpec((1, D), lambda g: (0, 0)),            # f_r
        pl.BlockSpec((1, D), lambda g: (0, 0)),            # f_i
        pl.BlockSpec((1, D), lambda g: (0, 0)),            # ln_w (real half)
        pl.BlockSpec((1, D), lambda g: (0, 0)),            # ln_w (imag half)
        pl.BlockSpec((1, D), lambda g: (0, 0)),            # ln_b (real half)
        pl.BlockSpec((1, D), lambda g: (0, 0)),            # ln_b (imag half)
        pl.BlockSpec((D, D), lambda g: (0, 0)),            # w_out (real rows, bf16)
        pl.BlockSpec((D, D), lambda g: (0, 0)),            # w_out (imag rows, bf16)
        pl.BlockSpec((1, D), lambda g: (0, 0)),            # b_out
    ]
    out_specs = pl.BlockSpec((None, M, D), lambda g: (g, 0, 0))

    flops = 2 * B * L * D * (4 * D) + 2 * B * L * (2 * D) * D + 12 * B * L * D
    bytes_accessed = (B * L * D * (2 + 4)            # x slab (bf16) + out (f32)
                      + 6 * D * D * 2                # resident weights (bf16)
                      + 16 * D * 4)                  # small vectors
    transcendentals = 2 * B * L * D                  # fused sigmoid gate

    out_blk = pl.pallas_call(
        kernel,
        out_shape=jax.ShapeDtypeStruct((G, M, D), jnp.float32),
        grid=(G,),
        in_specs=in_specs,
        out_specs=out_specs,
        scratch_shapes=[pltpu.VMEM((M, D), jnp.float32),   # scan real / gated
                        pltpu.VMEM((M, D), jnp.float32),   # scan imag / gated
                        pltpu.VMEM((M, D), jnp.float32),   # gate pre-act real
                        pltpu.VMEM((M, D), jnp.float32)],  # gate pre-act imag
        compiler_params=pltpu.CompilerParams(
            dimension_semantics=("parallel",),
            vmem_limit_bytes=vmem_limit),
        cost_estimate=pl.CostEstimate(flops=flops,
                                      transcendentals=transcendentals,
                                      bytes_accessed=bytes_accessed),
    )(x_blk, w_in_s, b_in_s, f_r, f_i,
      ln_wr, ln_wi, ln_br, ln_bi, w_out_r, w_out_i, b_out)

    # Undo the layout plumbing, drop padded batch rows.
    out = (out_blk.reshape(G, L, TB, D)
                  .transpose(0, 2, 1, 3)
                  .reshape(B, L, D))
    return out[:B0]


def lru_reference(x, params, bf16_matmul=False):
    """Pure-JAX reference of the PyTorch forward (dropout = identity)."""
    w_in, b_in, nu_log, theta_log, gamma_log, ln_w, ln_b, w_out, b_out = params
    B, L, D = x.shape
    if bf16_matmul:
        u = jnp.dot(x.astype(jnp.bfloat16), w_in.astype(jnp.bfloat16),
                    preferred_element_type=jnp.float32) + b_in[0]
    else:
        u = x @ w_in + b_in[0]
    in_r, in_i, o = u[..., :D], u[..., D:2 * D], u[..., 2 * D:]
    nu = jnp.exp(-jnp.exp(nu_log[0]))
    theta = jnp.exp(theta_log[0])
    gamma = jnp.exp(gamma_log[0])
    f_r = nu * jnp.cos(theta)
    f_i = nu * jnp.sin(theta)
    in_r = gamma * in_r
    in_i = gamma * in_i

    def step(carry, xs):
        hr, hi = carry
        xr, xi = xs
        nr = f_r * hr - f_i * hi + xr
        ni = f_r * hi + f_i * hr + xi
        return (nr, ni), (nr, ni)

    def scan_one(xr, xi):  # (L, D) each
        (_, _), (out_r, out_i) = lax.scan(
            step, (jnp.zeros((D,)), jnp.zeros((D,))), (xr, xi))
        return out_r, out_i

    out_r, out_i = jax.vmap(scan_one)(in_r, in_i)
    y = jnp.concatenate([out_r, out_i], axis=-1) * (o * jax.nn.sigmoid(o))
    mean = jnp.mean(y, axis=-1, keepdims=True)
    var = jnp.mean((y - mean) ** 2, axis=-1, keepdims=True)
    y_n = (y - mean) * lax.rsqrt(var + 1e-5)
    y_n = y_n * ln_w[0] + ln_b[0]
    if bf16_matmul:
        return jnp.dot(y_n.astype(jnp.bfloat16), w_out.astype(jnp.bfloat16),
                       preferred_element_type=jnp.float32) + b_out[0]
    return y_n @ w_out + b_out[0]


def make_params(key, d_model):
    D = d_model
    ks = jax.random.split(key, 8)
    s_in = 1.0 / np.sqrt(D)
    w_in = jax.random.uniform(ks[0], (D, 4 * D), jnp.float32, -s_in, s_in)
    b_in = jax.random.uniform(ks[1], (1, 4 * D), jnp.float32, -s_in, s_in)

    r_min, r_max = 0.9, 0.999
    u1 = jax.random.uniform(ks[2], (D,), jnp.float32)
    u2 = jax.random.uniform(ks[3], (D,), jnp.float32)
    nu_log = jnp.log(-0.5 * jnp.log(u1 * (r_max ** 2 - r_min ** 2)
                                    + r_min ** 2))
    theta_log = jnp.log(u2 * np.pi * 2)
    gamma_log = jnp.log(jnp.sqrt(1.0 - jnp.exp(-jnp.exp(nu_log)) ** 2))
    nu_log = nu_log.reshape(1, D)
    theta_log = theta_log.reshape(1, D)
    gamma_log = gamma_log.reshape(1, D)

    ln_w = jnp.ones((1, 2 * D), jnp.float32)
    ln_b = jnp.zeros((1, 2 * D), jnp.float32)

    s_out = 1.0 / np.sqrt(2 * D)
    w_out = jax.random.uniform(ks[4], (2 * D, D), jnp.float32, -s_out, s_out)
    b_out = jax.random.uniform(ks[5], (1, D), jnp.float32, -s_out, s_out)

    return (w_in, b_in, nu_log, theta_log, gamma_log, ln_w, ln_b,
            w_out, b_out)


if __name__ == "__main__":
    B, L, D = 8, 8, 32
    key = jax.random.PRNGKey(0)
    k_param, k_x = jax.random.split(key)
    params = make_params(k_param, D)
    x = jax.random.normal(k_x, (B, L, D), jnp.float32)

    out = jax.block_until_ready(lru_layer(x, params))
    ref_bf16 = jax.block_until_ready(lru_reference(x, params, bf16_matmul=True))
    ref_f32 = jax.block_until_ready(lru_reference(x, params, bf16_matmul=False))

    assert out.shape == (B, L, D)
    # Apples-to-apples check against a reference using the same bf16 matmul
    # operands (tight), plus a looser check against the pure-f32 reference
    # (bounds the bf16-cast error).
    np.testing.assert_allclose(np.asarray(out), np.asarray(ref_bf16),
                               rtol=3e-2, atol=3e-2)
    np.testing.assert_allclose(np.asarray(out), np.asarray(ref_f32),
                               rtol=6e-2, atol=6e-2)
    print("KERNEL_OK")
</pallas_src>

<mosaic_0001>
module attributes {stable_mosaic.version = 11 : i64} {
  func.func @lru_kernel(%arg0: i32, %arg1: memref<1x64x32xbf16, #tpu.memory_space<vmem>>, %arg2: memref<32x128xbf16, #tpu.memory_space<vmem>>, %arg3: memref<1x128xf32, #tpu.memory_space<vmem>>, %arg4: memref<1x32xf32, #tpu.memory_space<vmem>>, %arg5: memref<1x32xf32, #tpu.memory_space<vmem>>, %arg6: memref<1x32xf32, #tpu.memory_space<vmem>>, %arg7: memref<1x32xf32, #tpu.memory_space<vmem>>, %arg8: memref<1x32xf32, #tpu.memory_space<vmem>>, %arg9: memref<1x32xf32, #tpu.memory_space<vmem>>, %arg10: memref<32x32xbf16, #tpu.memory_space<vmem>>, %arg11: memref<32x32xbf16, #tpu.memory_space<vmem>>, %arg12: memref<1x32xf32, #tpu.memory_space<vmem>>, %arg13: memref<1x64x32xf32, #tpu.memory_space<vmem>>, %arg14: memref<64x32xf32, #tpu.memory_space<vmem>>, %arg15: memref<64x32xf32, #tpu.memory_space<vmem>>, %arg16: memref<64x32xf32, #tpu.memory_space<vmem>>, %arg17: memref<64x32xf32, #tpu.memory_space<vmem>>) attributes {dimension_semantics = [#tpu.dimension_semantics<parallel>], iteration_bounds = array<i64: 1>, scalar_prefetch = 0 : i64, scratch_operands = 4 : i64, tpu.core_type = #tpu.core_type<tc>, window_params = [{transform_indices = @transform_0, window_bounds = array<i64: 1, 64, 32>}, {pipeline_mode = #tpu.pipeline_mode<synchronous>, transform_indices = @transform_1, window_bounds = array<i64: 32, 128>}, {pipeline_mode = #tpu.pipeline_mode<synchronous>, transform_indices = @transform_2, window_bounds = array<i64: 1, 128>}, {pipeline_mode = #tpu.pipeline_mode<synchronous>, transform_indices = @transform_3, window_bounds = array<i64: 1, 32>}, {pipeline_mode = #tpu.pipeline_mode<synchronous>, transform_indices = @transform_4, window_bounds = array<i64: 1, 32>}, {pipeline_mode = #tpu.pipeline_mode<synchronous>, transform_indices = @transform_5, window_bounds = array<i64: 1, 32>}, {pipeline_mode = #tpu.pipeline_mode<synchronous>, transform_indices = @transform_6, window_bounds = array<i64: 1, 32>}, {pipeline_mode = #tpu.pipeline_mode<synchronous>, transform_indices = @transform_7, window_bounds = array<i64: 1, 32>}, {pipeline_mode = #tpu.pipeline_mode<synchronous>, transform_indices = @transform_8, window_bounds = array<i64: 1, 32>}, {pipeline_mode = #tpu.pipeline_mode<synchronous>, transform_indices = @transform_9, window_bounds = array<i64: 32, 32>}, {pipeline_mode = #tpu.pipeline_mode<synchronous>, transform_indices = @transform_10, window_bounds = array<i64: 32, 32>}, {pipeline_mode = #tpu.pipeline_mode<synchronous>, transform_indices = @transform_11, window_bounds = array<i64: 1, 32>}, {transform_indices = @transform_12, window_bounds = array<i64: 1, 64, 32>}]} {
    %c0 = arith.constant 0 : index
    %c0_0 = arith.constant 0 : index
    %c0_1 = arith.constant 0 : index
    %0 = vector.load %arg1[%c0, %c0_0, %c0_1] : memref<1x64x32xbf16, #tpu.memory_space<vmem>>, vector<1x64x32xbf16>
    %1 = vector.shape_cast %0 : vector<1x64x32xbf16> to vector<64x32xbf16>
    %c0_2 = arith.constant 0 : index
    %c0_3 = arith.constant 0 : index
    %2 = vector.load %arg2[%c0_2, %c0_3] : memref<32x128xbf16, #tpu.memory_space<vmem>>, vector<32x128xbf16>
    %cst = arith.constant dense<0.000000e+00> : vector<64x128xf32>
    %3 = tpu.matmul %1, %2, %cst {dimension_numbers = #tpu.dot_dimension_numbers<[1], [0], [0], [1], [0, 0, 1, 1], [], []>} : vector<64x32xbf16>, vector<32x128xbf16>, vector<64x128xf32> -> vector<64x128xf32>
    %c0_4 = arith.constant 0 : index
    %c0_5 = arith.constant 0 : index
    %4 = vector.load %arg3[%c0_4, %c0_5] : memref<1x128xf32, #tpu.memory_space<vmem>>, vector<1x128xf32>
    %5 = vector.broadcast %4 : vector<1x128xf32> to vector<64x128xf32>
    %6 = arith.addf %3, %5 : vector<64x128xf32>
    %7 = vector.extract_strided_slice %6 {offsets = [0, 0], sizes = [64, 32], strides = [1, 1]} : vector<64x128xf32> to vector<64x32xf32>
    %c0_6 = arith.constant 0 : index
    %c0_7 = arith.constant 0 : index
    %8 = vector.load %arg14[%c0_6, %c0_7] : memref<64x32xf32, #tpu.memory_space<vmem>>, vector<64x32xf32>
    tpu.vector_store %arg14[%c0_6, %c0_7], %7 {strides = array<i32>} : memref<64x32xf32, #tpu.memory_space<vmem>>, vector<64x32xf32>,
    %9 = vector.extract_strided_slice %6 {offsets = [0, 32], sizes = [64, 32], strides = [1, 1]} : vector<64x128xf32> to vector<64x32xf32>
    %c0_8 = arith.constant 0 : index
    %c0_9 = arith.constant 0 : index
    %10 = vector.load %arg15[%c0_8, %c0_9] : memref<64x32xf32, #tpu.memory_space<vmem>>, vector<64x32xf32>
    tpu.vector_store %arg15[%c0_8, %c0_9], %9 {strides = array<i32>} : memref<64x32xf32, #tpu.memory_space<vmem>>, vector<64x32xf32>,
    %11 = vector.extract_strided_slice %6 {offsets = [0, 64], sizes = [64, 32], strides = [1, 1]} : vector<64x128xf32> to vector<64x32xf32>
    %c0_10 = arith.constant 0 : index
    %c0_11 = arith.constant 0 : index
    %12 = vector.load %arg16[%c0_10, %c0_11] : memref<64x32xf32, #tpu.memory_space<vmem>>, vector<64x32xf32>
    tpu.vector_store %arg16[%c0_10, %c0_11], %11 {strides = array<i32>} : memref<64x32xf32, #tpu.memory_space<vmem>>, vector<64x32xf32>,
    %13 = vector.extract_strided_slice %6 {offsets = [0, 96], sizes = [64, 32], strides = [1, 1]} : vector<64x128xf32> to vector<64x32xf32>
    %c0_12 = arith.constant 0 : index
    %c0_13 = arith.constant 0 : index
    %14 = vector.load %arg17[%c0_12, %c0_13] : memref<64x32xf32, #tpu.memory_space<vmem>>, vector<64x32xf32>
    tpu.vector_store %arg17[%c0_12, %c0_13], %13 {strides = array<i32>} : memref<64x32xf32, #tpu.memory_space<vmem>>, vector<64x32xf32>,
    %c0_14 = arith.constant 0 : index
    %c0_15 = arith.constant 0 : index
    %15 = vector.load %arg4[%c0_14, %c0_15] : memref<1x32xf32, #tpu.memory_space<vmem>>, vector<1x32xf32>
    %16 = vector.shape_cast %15 : vector<1x32xf32> to vector<1x32xf32>
    %17 = vector.broadcast %16 : vector<1x32xf32> to vector<8x32xf32>
    %c0_16 = arith.constant 0 : index
    %c0_17 = arith.constant 0 : index
    %18 = vector.load %arg5[%c0_16, %c0_17] : memref<1x32xf32, #tpu.memory_space<vmem>>, vector<1x32xf32>
    %19 = vector.shape_cast %18 : vector<1x32xf32> to vector<1x32xf32>
    %20 = vector.broadcast %19 : vector<1x32xf32> to vector<8x32xf32>
    %cst_18 = arith.constant 0.000000e+00 : f32
    %21 = vector.broadcast %cst_18 : f32 to vector<8x32xf32>
    %c0_i32 = arith.constant 0 : i32
    %c8_i32 = arith.constant 8 : i32
    %22 = arith.muli %c0_i32, %c8_i32 : i32
    %23 = tpu.assume_multiple %22, 8 : i32
    %24 = arith.mulf %17, %21 : vector<8x32xf32>
    %25 = arith.mulf %20, %21 : vector<8x32xf32>
    %26 = arith.subf %24, %25 : vector<8x32xf32>
    %27 = arith.index_cast %23 : i32 to index
    %c0_19 = arith.constant 0 : index
    %28 = vector.load %arg14[%27, %c0_19] : memref<64x32xf32, #tpu.memory_space<vmem>>, vector<8x32xf32>
    %29 = arith.addf %26, %28 : vector<8x32xf32>
    %30 = arith.mulf %17, %21 : vector<8x32xf32>
    %31 = arith.mulf %20, %21 : vector<8x32xf32>
    %32 = arith.addf %30, %31 : vector<8x32xf32>
    %33 = arith.index_cast %23 : i32 to index
    %c0_20 = arith.constant 0 : index
    %34 = vector.load %arg15[%33, %c0_20] : memref<64x32xf32, #tpu.memory_space<vmem>>, vector<8x32xf32>
    %35 = arith.addf %32, %34 : vector<8x32xf32>
    %36 = arith.index_cast %23 : i32 to index
    %c0_21 = arith.constant 0 : index
    %37 = vector.load %arg16[%36, %c0_21] : memref<64x32xf32, #tpu.memory_space<vmem>>, vector<8x32xf32>
    %38 = arith.index_cast %23 : i32 to index
    %c0_22 = arith.constant 0 : index
    %39 = vector.load %arg17[%38, %c0_22] : memref<64x32xf32, #tpu.memory_space<vmem>>, vector<8x32xf32>
    %40 = arith.negf %37 : vector<8x32xf32>
    %41 = math.exp %40 : vector<8x32xf32>
    %cst_23 = arith.constant 1.000000e+00 : f32
    %42 = vector.broadcast %cst_23 : f32 to vector<8x32xf32>
    %43 = arith.addf %42, %41 : vector<8x32xf32>
    %44 = arith.divf %42, %43 : vector<8x32xf32>
    %45 = arith.mulf %37, %44 : vector<8x32xf32>
    %46 = arith.mulf %29, %45 : vector<8x32xf32>
    %47 = arith.index_cast %23 : i32 to index
    %c0_24 = arith.constant 0 : index
    %48 = vector.load %arg14[%47, %c0_24] : memref<64x32xf32, #tpu.memory_space<vmem>>, vector<8x32xf32>
    tpu.vector_store %arg14[%47, %c0_24], %46 {strides = array<i32>} : memref<64x32xf32, #tpu.memory_space<vmem>>, vector<8x32xf32>,
    %49 = arith.negf %39 : vector<8x32xf32>
    %50 = math.exp %49 : vector<8x32xf32>
    %cst_25 = arith.constant 1.000000e+00 : f32
    %51 = vector.broadcast %cst_25 : f32 to vector<8x32xf32>
    %52 = arith.addf %51, %50 : vector<8x32xf32>
    %53 = arith.divf %51, %52 : vector<8x32xf32>
    %54 = arith.mulf %39, %53 : vector<8x32xf32>
    %55 = arith.mulf %35, %54 : vector<8x32xf32>
    %56 = arith.index_cast %23 : i32 to index
    %c0_26 = arith.constant 0 : index
    %57 = vector.load %arg15[%56, %c0_26] : memref<64x32xf32, #tpu.memory_space<vmem>>, vector<8x32xf32>
    tpu.vector_store %arg15[%56, %c0_26], %55 {strides = array<i32>} : memref<64x32xf32, #tpu.memory_space<vmem>>, vector<8x32xf32>,
    %c1_i32 = arith.constant 1 : i32
    %c8_i32_27 = arith.constant 8 : i32
    %58 = arith.muli %c1_i32, %c8_i32_27 : i32
    %59 = tpu.assume_multiple %58, 8 : i32
    %60 = arith.mulf %17, %29 : vector<8x32xf32>
    %61 = arith.mulf %20, %35 : vector<8x32xf32>
    %62 = arith.subf %60, %61 : vector<8x32xf32>
    %63 = arith.index_cast %59 : i32 to index
    %c0_28 = arith.constant 0 : index
    %64 = vector.load %arg14[%63, %c0_28] : memref<64x32xf32, #tpu.memory_space<vmem>>, vector<8x32xf32>
    %65 = arith.addf %62, %64 : vector<8x32xf32>
    %66 = arith.mulf %17, %35 : vector<8x32xf32>
    %67 = arith.mulf %20, %29 : vector<8x32xf32>
    %68 = arith.addf %66, %67 : vector<8x32xf32>
    %69 = arith.index_cast %59 : i32 to index
    %c0_29 = arith.constant 0 : index
    %70 = vector.load %arg15[%69, %c0_29] : memref<64x32xf32, #tpu.memory_space<vmem>>, vector<8x32xf32>
    %71 = arith.addf %68, %70 : vector<8x32xf32>
    %72 = arith.index_cast %59 : i32 to index
    %c0_30 = arith.constant 0 : index
    %73 = vector.load %arg16[%72, %c0_30] : memref<64x32xf32, #tpu.memory_space<vmem>>, vector<8x32xf32>
    %74 = arith.index_cast %59 : i32 to index
    %c0_31 = arith.constant 0 : index
    %75 = vector.load %arg17[%74, %c0_31] : memref<64x32xf32, #tpu.memory_space<vmem>>, vector<8x32xf32>
    %76 = arith.negf %73 : vector<8x32xf32>
    %77 = math.exp %76 : vector<8x32xf32>
    %cst_32 = arith.constant 1.000000e+00 : f32
    %78 = vector.broadcast %cst_32 : f32 to vector<8x32xf32>
    %79 = arith.addf %78, %77 : vector<8x32xf32>
    %80 = arith.divf %78, %79 : vector<8x32xf32>
    %81 = arith.mulf %73, %80 : vector<8x32xf32>
    %82 = arith.mulf %65, %81 : vector<8x32xf32>
    %83 = arith.index_cast %59 : i32 to index
    %c0_33 = arith.constant 0 : index
    %84 = vector.load %arg14[%83, %c0_33] : memref<64x32xf32, #tpu.memory_space<vmem>>, vector<8x32xf32>
    tpu.vector_store %arg14[%83, %c0_33], %82 {strides = array<i32>} : memref<64x32xf32, #tpu.memory_space<vmem>>, vector<8x32xf32>,
    %85 = arith.negf %75 : vector<8x32xf32>
    %86 = math.exp %85 : vector<8x32xf32>
    %cst_34 = arith.constant 1.000000e+00 : f32
    %87 = vector.broadcast %cst_34 : f32 to vector<8x32xf32>
    %88 = arith.addf %87, %86 : vector<8x32xf32>
    %89 = arith.divf %87, %88 : vector<8x32xf32>
    %90 = arith.mulf %75, %89 : vector<8x32xf32>
    %91 = arith.mulf %71, %90 : vector<8x32xf32>
    %92 = arith.index_cast %59 : i32 to index
    %c0_35 = arith.constant 0 : index
    %93 = vector.load %arg15[%92, %c0_35] : memref<64x32xf32, #tpu.memory_space<vmem>>, vector<8x32xf32>
    tpu.vector_store %arg15[%92, %c0_35], %91 {strides = array<i32>} : memref<64x32xf32, #tpu.memory_space<vmem>>, vector<8x32xf32>,
    %c2_i32 = arith.constant 2 : i32
    %c8_i32_36 = arith.constant 8 : i32
    %94 = arith.muli %c2_i32, %c8_i32_36 : i32
    %95 = tpu.assume_multiple %94, 8 : i32
    %96 = arith.mulf %17, %65 : vector<8x32xf32>
    %97 = arith.mulf %20, %71 : vector<8x32xf32>
    %98 = arith.subf %96, %97 : vector<8x32xf32>
    %99 = arith.index_cast %95 : i32 to index
    %c0_37 = arith.constant 0 : index
    %100 = vector.load %arg14[%99, %c0_37] : memref<64x32xf32, #tpu.memory_space<vmem>>, vector<8x32xf32>
    %101 = arith.addf %98, %100 : vector<8x32xf32>
    %102 = arith.mulf %17, %71 : vector<8x32xf32>
    %103 = arith.mulf %20, %65 : vector<8x32xf32>
    %104 = arith.addf %102, %103 : vector<8x32xf32>
    %105 = arith.index_cast %95 : i32 to index
    %c0_38 = arith.constant 0 : index
    %106 = vector.load %arg15[%105, %c0_38] : memref<64x32xf32, #tpu.memory_space<vmem>>, vector<8x32xf32>
    %107 = arith.addf %104, %106 : vector<8x32xf32>
    %108 = arith.index_cast %95 : i32 to index
    %c0_39 = arith.constant 0 : index
    %109 = vector.load %arg16[%108, %c0_39] : memref<64x32xf32, #tpu.memory_space<vmem>>, vector<8x32xf32>
    %110 = arith.index_cast %95 : i32 to index
    %c0_40 = arith.constant 0 : index
    %111 = vector.load %arg17[%110, %c0_40] : memref<64x32xf32, #tpu.memory_space<vmem>>, vector<8x32xf32>
    %112 = arith.negf %109 : vector<8x32xf32>
    %113 = math.exp %112 : vector<8x32xf32>
    %cst_41 = arith.constant 1.000000e+00 : f32
    %114 = vector.broadcast %cst_41 : f32 to vector<8x32xf32>
    %115 = arith.addf %114, %113 : vector<8x32xf32>
    %116 = arith.divf %114, %115 : vector<8x32xf32>
    %117 = arith.mulf %109, %116 : vector<8x32xf32>
    %118 = arith.mulf %101, %117 : vector<8x32xf32>
    %119 = arith.index_cast %95 : i32 to index
    %c0_42 = arith.constant 0 : index
    %120 = vector.load %arg14[%119, %c0_42] : memref<64x32xf32, #tpu.memory_space<vmem>>, vector<8x32xf32>
    tpu.vector_store %arg14[%119, %c0_42], %118 {strides = array<i32>} : memref<64x32xf32, #tpu.memory_space<vmem>>, vector<8x32xf32>,
    %121 = arith.negf %111 : vector<8x32xf32>
    %122 = math.exp %121 : vector<8x32xf32>
    %cst_43 = arith.constant 1.000000e+00 : f32
    %123 = vector.broadcast %cst_43 : f32 to vector<8x32xf32>
    %124 = arith.addf %123, %122 : vector<8x32xf32>
    %125 = arith.divf %123, %124 : vector<8x32xf32>
    %126 = arith.mulf %111, %125 : vector<8x32xf32>
    %127 = arith.mulf %107, %126 : vector<8x32xf32>
    %128 = arith.index_cast %95 : i32 to index
    %c0_44 = arith.constant 0 : index
    %129 = vector.load %arg15[%128, %c0_44] : memref<64x32xf32, #tpu.memory_space<vmem>>, vector<8x32xf32>
    tpu.vector_store %arg15[%128, %c0_44], %127 {strides = array<i32>} : memref<64x32xf32, #tpu.memory_space<vmem>>, vector<8x32xf32>,
    %c3_i32 = arith.constant 3 : i32
    %c8_i32_45 = arith.constant 8 : i32
    %130 = arith.muli %c3_i32, %c8_i32_45 : i32
    %131 = tpu.assume_multiple %130, 8 : i32
    %132 = arith.mulf %17, %101 : vector<8x32xf32>
    %133 = arith.mulf %20, %107 : vector<8x32xf32>
    %134 = arith.subf %132, %133 : vector<8x32xf32>
    %135 = arith.index_cast %131 : i32 to index
    %c0_46 = arith.constant 0 : index
    %136 = vector.load %arg14[%135, %c0_46] : memref<64x32xf32, #tpu.memory_space<vmem>>, vector<8x32xf32>
    %137 = arith.addf %134, %136 : vector<8x32xf32>
    %138 = arith.mulf %17, %107 : vector<8x32xf32>
    %139 = arith.mulf %20, %101 : vector<8x32xf32>
    %140 = arith.addf %138, %139 : vector<8x32xf32>
    %141 = arith.index_cast %131 : i32 to index
    %c0_47 = arith.constant 0 : index
    %142 = vector.load %arg15[%141, %c0_47] : memref<64x32xf32, #tpu.memory_space<vmem>>, vector<8x32xf32>
    %143 = arith.addf %140, %142 : vector<8x32xf32>
    %144 = arith.index_cast %131 : i32 to index
    %c0_48 = arith.constant 0 : index
    %145 = vector.load %arg16[%144, %c0_48] : memref<64x32xf32, #tpu.memory_space<vmem>>, vector<8x32xf32>
    %146 = arith.index_cast %131 : i32 to index
    %c0_49 = arith.constant 0 : index
    %147 = vector.load %arg17[%146, %c0_49] : memref<64x32xf32, #tpu.memory_space<vmem>>, vector<8x32xf32>
    %148 = arith.negf %145 : vector<8x32xf32>
    %149 = math.exp %148 : vector<8x32xf32>
    %cst_50 = arith.constant 1.000000e+00 : f32
    %150 = vector.broadcast %cst_50 : f32 to vector<8x32xf32>
    %151 = arith.addf %150, %149 : vector<8x32xf32>
    %152 = arith.divf %150, %151 : vector<8x32xf32>
    %153 = arith.mulf %145, %152 : vector<8x32xf32>
    %154 = arith.mulf %137, %153 : vector<8x32xf32>
    %155 = arith.index_cast %131 : i32 to index
    %c0_51 = arith.constant 0 : index
    %156 = vector.load %arg14[%155, %c0_51] : memref<64x32xf32, #tpu.memory_space<vmem>>, vector<8x32xf32>
    tpu.vector_store %arg14[%155, %c0_51], %154 {strides = array<i32>} : memref<64x32xf32, #tpu.memory_space<vmem>>, vector<8x32xf32>,
    %157 = arith.negf %147 : vector<8x32xf32>
    %158 = math.exp %157 : vector<8x32xf32>
    %cst_52 = arith.constant 1.000000e+00 : f32
    %159 = vector.broadcast %cst_52 : f32 to vector<8x32xf32>
    %160 = arith.addf %159, %158 : vector<8x32xf32>
    %161 = arith.divf %159, %160 : vector<8x32xf32>
    %162 = arith.mulf %147, %161 : vector<8x32xf32>
    %163 = arith.mulf %143, %162 : vector<8x32xf32>
    %164 = arith.index_cast %131 : i32 to index
    %c0_53 = arith.constant 0 : index
    %165 = vector.load %arg15[%164, %c0_53] : memref<64x32xf32, #tpu.memory_space<vmem>>, vector<8x32xf32>
    tpu.vector_store %arg15[%164, %c0_53], %163 {strides = array<i32>} : memref<64x32xf32, #tpu.memory_space<vmem>>, vector<8x32xf32>,
    %c4_i32 = arith.constant 4 : i32
    %c8_i32_54 = arith.constant 8 : i32
    %166 = arith.muli %c4_i32, %c8_i32_54 : i32
    %167 = tpu.assume_multiple %166, 8 : i32
    %168 = arith.mulf %17, %137 : vector<8x32xf32>
    %169 = arith.mulf %20, %143 : vector<8x32xf32>
    %170 = arith.subf %168, %169 : vector<8x32xf32>
    %171 = arith.index_cast %167 : i32 to index
    %c0_55 = arith.constant 0 : index
    %172 = vector.load %arg14[%171, %c0_55] : memref<64x32xf32, #tpu.memory_space<vmem>>, vector<8x32xf32>
    %173 = arith.addf %170, %172 : vector<8x32xf32>
    %174 = arith.mulf %17, %143 : vector<8x32xf32>
    %175 = arith.mulf %20, %137 : vector<8x32xf32>
    %176 = arith.addf %174, %175 : vector<8x32xf32>
    %177 = arith.index_cast %167 : i32 to index
    %c0_56 = arith.constant 0 : index
    %178 = vector.load %arg15[%177, %c0_56] : memref<64x32xf32, #tpu.memory_space<vmem>>, vector<8x32xf32>
    %179 = arith.addf %176, %178 : vector<8x32xf32>
    %180 = arith.index_cast %167 : i32 to index
    %c0_57 = arith.constant 0 : index
    %181 = vector.load %arg16[%180, %c0_57] : memref<64x32xf32, #tpu.memory_space<vmem>>, vector<8x32xf32>
    %182 = arith.index_cast %167 : i32 to index
    %c0_58 = arith.constant 0 : index
    %183 = vector.load %arg17[%182, %c0_58] : memref<64x32xf32, #tpu.memory_space<vmem>>, vector<8x32xf32>
    %184 = arith.negf %181 : vector<8x32xf32>
    %185 = math.exp %184 : vector<8x32xf32>
    %cst_59 = arith.constant 1.000000e+00 : f32
    %186 = vector.broadcast %cst_59 : f32 to vector<8x32xf32>
    %187 = arith.addf %186, %185 : vector<8x32xf32>
    %188 = arith.divf %186, %187 : vector<8x32xf32>
    %189 = arith.mulf %181, %188 : vector<8x32xf32>
    %190 = arith.mulf %173, %189 : vector<8x32xf32>
    %191 = arith.index_cast %167 : i32 to index
    %c0_60 = arith.constant 0 : index
    %192 = vector.load %arg14[%191, %c0_60] : memref<64x32xf32, #tpu.memory_space<vmem>>, vector<8x32xf32>
    tpu.vector_store %arg14[%191, %c0_60], %190 {strides = array<i32>} : memref<64x32xf32, #tpu.memory_space<vmem>>, vector<8x32xf32>,
    %193 = arith.negf %183 : vector<8x32xf32>
    %194 = math.exp %193 : vector<8x32xf32>
    %cst_61 = arith.constant 1.000000e+00 : f32
    %195 = vector.broadcast %cst_61 : f32 to vector<8x32xf32>
    %196 = arith.addf %195, %194 : vector<8x32xf32>
    %197 = arith.divf %195, %196 : vector<8x32xf32>
    %198 = arith.mulf %183, %197 : vector<8x32xf32>
    %199 = arith.mulf %179, %198 : vector<8x32xf32>
    %200 = arith.index_cast %167 : i32 to index
    %c0_62 = arith.constant 0 : index
    %201 = vector.load %arg15[%200, %c0_62] : memref<64x32xf32, #tpu.memory_space<vmem>>, vector<8x32xf32>
    tpu.vector_store %arg15[%200, %c0_62], %199 {strides = array<i32>} : memref<64x32xf32, #tpu.memory_space<vmem>>, vector<8x32xf32>,
    %c5_i32 = arith.constant 5 : i32
    %c8_i32_63 = arith.constant 8 : i32
    %202 = arith.muli %c5_i32, %c8_i32_63 : i32
    %203 = tpu.assume_multiple %202, 8 : i32
    %204 = arith.mulf %17, %173 : vector<8x32xf32>
    %205 = arith.mulf %20, %179 : vector<8x32xf32>
    %206 = arith.subf %204, %205 : vector<8x32xf32>
    %207 = arith.index_cast %203 : i32 to index
    %c0_64 = arith.constant 0 : index
    %208 = vector.load %arg14[%207, %c0_64] : memref<64x32xf32, #tpu.memory_space<vmem>>, vector<8x32xf32>
    %209 = arith.addf %206, %208 : vector<8x32xf32>
    %210 = arith.mulf %17, %179 : vector<8x32xf32>
    %211 = arith.mulf %20, %173 : vector<8x32xf32>
    %212 = arith.addf %210, %211 : vector<8x32xf32>
    %213 = arith.index_cast %203 : i32 to index
    %c0_65 = arith.constant 0 : index
    %214 = vector.load %arg15[%213, %c0_65] : memref<64x32xf32, #tpu.memory_space<vmem>>, vector<8x32xf32>
    %215 = arith.addf %212, %214 : vector<8x32xf32>
    %216 = arith.index_cast %203 : i32 to index
    %c0_66 = arith.constant 0 : index
    %217 = vector.load %arg16[%216, %c0_66] : memref<64x32xf32, #tpu.memory_space<vmem>>, vector<8x32xf32>
    %218 = arith.index_cast %203 : i32 to index
    %c0_67 = arith.constant 0 : index
    %219 = vector.load %arg17[%218, %c0_67] : memref<64x32xf32, #tpu.memory_space<vmem>>, vector<8x32xf32>
    %220 = arith.negf %217 : vector<8x32xf32>
    %221 = math.exp %220 : vector<8x32xf32>
    %cst_68 = arith.constant 1.000000e+00 : f32
    %222 = vector.broadcast %cst_68 : f32 to vector<8x32xf32>
    %223 = arith.addf %222, %221 : vector<8x32xf32>
    %224 = arith.divf %222, %223 : vector<8x32xf32>
    %225 = arith.mulf %217, %224 : vector<8x32xf32>
    %226 = arith.mulf %209, %225 : vector<8x32xf32>
    %227 = arith.index_cast %203 : i32 to index
    %c0_69 = arith.constant 0 : index
    %228 = vector.load %arg14[%227, %c0_69] : memref<64x32xf32, #tpu.memory_space<vmem>>, vector<8x32xf32>
    tpu.vector_store %arg14[%227, %c0_69], %226 {strides = array<i32>} : memref<64x32xf32, #tpu.memory_space<vmem>>, vector<8x32xf32>,
    %229 = arith.negf %219 : vector<8x32xf32>
    %230 = math.exp %229 : vector<8x32xf32>
    %cst_70 = arith.constant 1.000000e+00 : f32
    %231 = vector.broadcast %cst_70 : f32 to vector<8x32xf32>
    %232 = arith.addf %231, %230 : vector<8x32xf32>
    %233 = arith.divf %231, %232 : vector<8x32xf32>
    %234 = arith.mulf %219, %233 : vector<8x32xf32>
    %235 = arith.mulf %215, %234 : vector<8x32xf32>
    %236 = arith.index_cast %203 : i32 to index
    %c0_71 = arith.constant 0 : index
    %237 = vector.load %arg15[%236, %c0_71] : memref<64x32xf32, #tpu.memory_space<vmem>>, vector<8x32xf32>
    tpu.vector_store %arg15[%236, %c0_71], %235 {strides = array<i32>} : memref<64x32xf32, #tpu.memory_space<vmem>>, vector<8x32xf32>,
    %c6_i32 = arith.constant 6 : i32
    %c8_i32_72 = arith.constant 8 : i32
    %238 = arith.muli %c6_i32, %c8_i32_72 : i32
    %239 = tpu.assume_multiple %238, 8 : i32
    %240 = arith.mulf %17, %209 : vector<8x32xf32>
    %241 = arith.mulf %20, %215 : vector<8x32xf32>
    %242 = arith.subf %240, %241 : vector<8x32xf32>
    %243 = arith.index_cast %239 : i32 to index
    %c0_73 = arith.constant 0 : index
    %244 = vector.load %arg14[%243, %c0_73] : memref<64x32xf32, #tpu.memory_space<vmem>>, vector<8x32xf32>
    %245 = arith.addf %242, %244 : vector<8x32xf32>
    %246 = arith.mulf %17, %215 : vector<8x32xf32>
    %247 = arith.mulf %20, %209 : vector<8x32xf32>
    %248 = arith.addf %246, %247 : vector<8x32xf32>
    %249 = arith.index_cast %239 : i32 to index
    %c0_74 = arith.constant 0 : index
    %250 = vector.load %arg15[%249, %c0_74] : memref<64x32xf32, #tpu.memory_space<vmem>>, vector<8x32xf32>
    %251 = arith.addf %248, %250 : vector<8x32xf32>
    %252 = arith.index_cast %239 : i32 to index
    %c0_75 = arith.constant 0 : index
    %253 = vector.load %arg16[%252, %c0_75] : memref<64x32xf32, #tpu.memory_space<vmem>>, vector<8x32xf32>
    %254 = arith.index_cast %239 : i32 to index
    %c0_76 = arith.constant 0 : index
    %255 = vector.load %arg17[%254, %c0_76] : memref<64x32xf32, #tpu.memory_space<vmem>>, vector<8x32xf32>
    %256 = arith.negf %253 : vector<8x32xf32>
    %257 = math.exp %256 : vector<8x32xf32>
    %cst_77 = arith.constant 1.000000e+00 : f32
    %258 = vector.broadcast %cst_77 : f32 to vector<8x32xf32>
    %259 = arith.addf %258, %257 : vector<8x32xf32>
    %260 = arith.divf %258, %259 : vector<8x32xf32>
    %261 = arith.mulf %253, %260 : vector<8x32xf32>
    %262 = arith.mulf %245, %261 : vector<8x32xf32>
    %263 = arith.index_cast %239 : i32 to index
    %c0_78 = arith.constant 0 : index
    %264 = vector.load %arg14[%263, %c0_78] : memref<64x32xf32, #tpu.memory_space<vmem>>, vector<8x32xf32>
    tpu.vector_store %arg14[%263, %c0_78], %262 {strides = array<i32>} : memref<64x32xf32, #tpu.memory_space<vmem>>, vector<8x32xf32>,
    %265 = arith.negf %255 : vector<8x32xf32>
    %266 = math.exp %265 : vector<8x32xf32>
    %cst_79 = arith.constant 1.000000e+00 : f32
    %267 = vector.broadcast %cst_79 : f32 to vector<8x32xf32>
    %268 = arith.addf %267, %266 : vector<8x32xf32>
    %269 = arith.divf %267, %268 : vector<8x32xf32>
    %270 = arith.mulf %255, %269 : vector<8x32xf32>
    %271 = arith.mulf %251, %270 : vector<8x32xf32>
    %272 = arith.index_cast %239 : i32 to index
    %c0_80 = arith.constant 0 : index
    %273 = vector.load %arg15[%272, %c0_80] : memref<64x32xf32, #tpu.memory_space<vmem>>, vector<8x32xf32>
    tpu.vector_store %arg15[%272, %c0_80], %271 {strides = array<i32>} : memref<64x32xf32, #tpu.memory_space<vmem>>, vector<8x32xf32>,
    %c7_i32 = arith.constant 7 : i32
    %c8_i32_81 = arith.constant 8 : i32
    %274 = arith.muli %c7_i32, %c8_i32_81 : i32
    %275 = tpu.assume_multiple %274, 8 : i32
    %276 = arith.mulf %17, %245 : vector<8x32xf32>
    %277 = arith.mulf %20, %251 : vector<8x32xf32>
    %278 = arith.subf %276, %277 : vector<8x32xf32>
    %279 = arith.index_cast %275 : i32 to index
    %c0_82 = arith.constant 0 : index
    %280 = vector.load %arg14[%279, %c0_82] : memref<64x32xf32, #tpu.memory_space<vmem>>, vector<8x32xf32>
    %281 = arith.addf %278, %280 : vector<8x32xf32>
    %282 = arith.mulf %17, %251 : vector<8x32xf32>
    %283 = arith.mulf %20, %245 : vector<8x32xf32>
    %284 = arith.addf %282, %283 : vector<8x32xf32>
    %285 = arith.index_cast %275 : i32 to index
    %c0_83 = arith.constant 0 : index
    %286 = vector.load %arg15[%285, %c0_83] : memref<64x32xf32, #tpu.memory_space<vmem>>, vector<8x32xf32>
    %287 = arith.addf %284, %286 : vector<8x32xf32>
    %288 = arith.index_cast %275 : i32 to index
    %c0_84 = arith.constant 0 : index
    %289 = vector.load %arg16[%288, %c0_84] : memref<64x32xf32, #tpu.memory_space<vmem>>, vector<8x32xf32>
    %290 = arith.index_cast %275 : i32 to index
    %c0_85 = arith.constant 0 : index
    %291 = vector.load %arg17[%290, %c0_85] : memref<64x32xf32, #tpu.memory_space<vmem>>, vector<8x32xf32>
    %292 = arith.negf %289 : vector<8x32xf32>
    %293 = math.exp %292 : vector<8x32xf32>
    %cst_86 = arith.constant 1.000000e+00 : f32
    %294 = vector.broadcast %cst_86 : f32 to vector<8x32xf32>
    %295 = arith.addf %294, %293 : vector<8x32xf32>
    %296 = arith.divf %294, %295 : vector<8x32xf32>
    %297 = arith.mulf %289, %296 : vector<8x32xf32>
    %298 = arith.mulf %281, %297 : vector<8x32xf32>
    %299 = arith.index_cast %275 : i32 to index
    %c0_87 = arith.constant 0 : index
    %300 = vector.load %arg14[%299, %c0_87] : memref<64x32xf32, #tpu.memory_space<vmem>>, vector<8x32xf32>
    tpu.vector_store %arg14[%299, %c0_87], %298 {strides = array<i32>} : memref<64x32xf32, #tpu.memory_space<vmem>>, vector<8x32xf32>,
    %301 = arith.negf %291 : vector<8x32xf32>
    %302 = math.exp %301 : vector<8x32xf32>
    %cst_88 = arith.constant 1.000000e+00 : f32
    %303 = vector.broadcast %cst_88 : f32 to vector<8x32xf32>
    %304 = arith.addf %303, %302 : vector<8x32xf32>
    %305 = arith.divf %303, %304 : vector<8x32xf32>
    %306 = arith.mulf %291, %305 : vector<8x32xf32>
    %307 = arith.mulf %287, %306 : vector<8x32xf32>
    %308 = arith.index_cast %275 : i32 to index
    %c0_89 = arith.constant 0 : index
    %309 = vector.load %arg15[%308, %c0_89] : memref<64x32xf32, #tpu.memory_space<vmem>>, vector<8x32xf32>
    tpu.vector_store %arg15[%308, %c0_89], %307 {strides = array<i32>} : memref<64x32xf32, #tpu.memory_space<vmem>>, vector<8x32xf32>,
    %c8_i32_90 = arith.constant 8 : i32
    %c0_91 = arith.constant 0 : index
    %c0_92 = arith.constant 0 : index
    %310 = vector.load %arg14[%c0_91, %c0_92] : memref<64x32xf32, #tpu.memory_space<vmem>>, vector<64x32xf32>
    %c0_93 = arith.constant 0 : index
    %c0_94 = arith.constant 0 : index
    %311 = vector.load %arg15[%c0_93, %c0_94] : memref<64x32xf32, #tpu.memory_space<vmem>>, vector<64x32xf32>
    %cst_95 = arith.constant dense<0.000000e+00> : vector<64xf32>
    %312 = vector.multi_reduction <add>, %310, %cst_95 [1] : vector<64x32xf32> to vector<64xf32>
    %313 = vector.shape_cast %312 : vector<64xf32> to vector<64x1xf32>
    %cst_96 = arith.constant dense<0.000000e+00> : vector<64xf32>
    %314 = vector.multi_reduction <add>, %311, %cst_96 [1] : vector<64x32xf32> to vector<64xf32>
    %315 = vector.shape_cast %314 : vector<64xf32> to vector<64x1xf32>
    %316 = arith.addf %313, %315 : vector<64x1xf32>
    %317 = arith.mulf %310, %310 : vector<64x32xf32>
    %cst_97 = arith.constant dense<0.000000e+00> : vector<64xf32>
    %318 = vector.multi_reduction <add>, %317, %cst_97 [1] : vector<64x32xf32> to vector<64xf32>
    %319 = vector.shape_cast %318 : vector<64xf32> to vector<64x1xf32>
    %320 = arith.mulf %311, %311 : vector<64x32xf32>
    %cst_98 = arith.constant dense<0.000000e+00> : vector<64xf32>
    %321 = vector.multi_reduction <add>, %320, %cst_98 [1] : vector<64x32xf32> to vector<64xf32>
    %322 = vector.shape_cast %321 : vector<64xf32> to vector<64x1xf32>
    %323 = arith.addf %319, %322 : vector<64x1xf32>
    %cst_99 = arith.constant 1.562500e-02 : f32
    %324 = vector.broadcast %cst_99 : f32 to vector<64x1xf32>
    %325 = arith.mulf %316, %324 : vector<64x1xf32>
    %cst_100 = arith.constant 1.562500e-02 : f32
    %326 = vector.broadcast %cst_100 : f32 to vector<64x1xf32>
    %327 = arith.mulf %323, %326 : vector<64x1xf32>
    %328 = arith.mulf %325, %325 : vector<64x1xf32>
    %329 = arith.subf %327, %328 : vector<64x1xf32>
    %cst_101 = arith.constant 9.99999974E-6 : f32
    %330 = vector.broadcast %cst_101 : f32 to vector<64x1xf32>
    %331 = arith.addf %329, %330 : vector<64x1xf32>
    %332 = math.rsqrt %331 : vector<64x1xf32>
    %333 = vector.broadcast %325 : vector<64x1xf32> to vector<64x32xf32>
    %334 = arith.subf %310, %333 : vector<64x32xf32>
    %335 = vector.broadcast %332 : vector<64x1xf32> to vector<64x32xf32>
    %336 = arith.mulf %334, %335 : vector<64x32xf32>
    %c0_102 = arith.constant 0 : index
    %c0_103 = arith.constant 0 : index
    %337 = vector.load %arg6[%c0_102, %c0_103] : memref<1x32xf32, #tpu.memory_space<vmem>>, vector<1x32xf32>
    %338 = vector.broadcast %337 : vector<1x32xf32> to vector<64x32xf32>
    %339 = arith.mulf %336, %338 : vector<64x32xf32>
    %c0_104 = arith.constant 0 : index
    %c0_105 = arith.constant 0 : index
    %340 = vector.load %arg8[%c0_104, %c0_105] : memref<1x32xf32, #tpu.memory_space<vmem>>, vector<1x32xf32>
    %341 = vector.broadcast %340 : vector<1x32xf32> to vector<64x32xf32>
    %342 = arith.addf %339, %341 : vector<64x32xf32>
    %343 = vector.broadcast %325 : vector<64x1xf32> to vector<64x32xf32>
    %344 = arith.subf %311, %343 : vector<64x32xf32>
    %345 = vector.broadcast %332 : vector<64x1xf32> to vector<64x32xf32>
    %346 = arith.mulf %344, %345 : vector<64x32xf32>
    %c0_106 = arith.constant 0 : index
    %c0_107 = arith.constant 0 : index
    %347 = vector.load %arg7[%c0_106, %c0_107] : memref<1x32xf32, #tpu.memory_space<vmem>>, vector<1x32xf32>
    %348 = vector.broadcast %347 : vector<1x32xf32> to vector<64x32xf32>
    %349 = arith.mulf %346, %348 : vector<64x32xf32>
    %c0_108 = arith.constant 0 : index
    %c0_109 = arith.constant 0 : index
    %350 = vector.load %arg9[%c0_108, %c0_109] : memref<1x32xf32, #tpu.memory_space<vmem>>, vector<1x32xf32>
    %351 = vector.broadcast %350 : vector<1x32xf32> to vector<64x32xf32>
    %352 = arith.addf %349, %351 : vector<64x32xf32>
    %353 = arith.truncf %342 : vector<64x32xf32> to vector<64x32xbf16>
    %c0_110 = arith.constant 0 : index
    %c0_111 = arith.constant 0 : index
    %354 = vector.load %arg10[%c0_110, %c0_111] : memref<32x32xbf16, #tpu.memory_space<vmem>>, vector<32x32xbf16>
    %cst_112 = arith.constant dense<0.000000e+00> : vector<64x32xf32>
    %355 = tpu.matmul %353, %354, %cst_112 {dimension_numbers = #tpu.dot_dimension_numbers<[1], [0], [0], [1], [0, 0, 1, 1], [], []>} : vector<64x32xbf16>, vector<32x32xbf16>, vector<64x32xf32> -> vector<64x32xf32>
    %356 = arith.truncf %352 : vector<64x32xf32> to vector<64x32xbf16>
    %c0_113 = arith.constant 0 : index
    %c0_114 = arith.constant 0 : index
    %357 = vector.load %arg11[%c0_113, %c0_114] : memref<32x32xbf16, #tpu.memory_space<vmem>>, vector<32x32xbf16>
    %cst_115 = arith.constant dense<0.000000e+00> : vector<64x32xf32>
    %358 = tpu.matmul %356, %357, %cst_115 {dimension_numbers = #tpu.dot_dimension_numbers<[1], [0], [0], [1], [0, 0, 1, 1], [], []>} : vector<64x32xbf16>, vector<32x32xbf16>, vector<64x32xf32> -> vector<64x32xf32>
    %359 = arith.addf %355, %358 : vector<64x32xf32>
    %c0_116 = arith.constant 0 : index
    %c0_117 = arith.constant 0 : index
    %360 = vector.load %arg12[%c0_116, %c0_117] : memref<1x32xf32, #tpu.memory_space<vmem>>, vector<1x32xf32>
    %361 = vector.broadcast %360 : vector<1x32xf32> to vector<64x32xf32>
    %362 = arith.addf %359, %361 : vector<64x32xf32>
    %c0_118 = arith.constant 0 : index
    %c0_119 = arith.constant 0 : index
    %c0_120 = arith.constant 0 : index
    %363 = vector.load %arg13[%c0_118, %c0_119, %c0_120] : memref<1x64x32xf32, #tpu.memory_space<vmem>>, vector<1x64x32xf32>
    %364 = vector.shape_cast %363 : vector<1x64x32xf32> to vector<64x32xf32>
    %365 = vector.shape_cast %362 : vector<64x32xf32> to vector<1x64x32xf32>
    tpu.vector_store %arg13[%c0_118, %c0_119, %c0_120], %365 {strides = array<i32>} : memref<1x64x32xf32, #tpu.memory_space<vmem>>, vector<1x64x32xf32>,
    return
  }
  func.func @transform_0(%arg0: i32) -> (i32, i32, i32) {
    %c0_i32 = arith.constant 0 : i32
    %c0_i32_0 = arith.constant 0 : i32
    %c0_i32_1 = arith.constant 0 : i32
    return %arg0, %c0_i32, %c0_i32_0 : i32, i32, i32
  }
  func.func @transform_1(%arg0: i32) -> (i32, i32) {
    %c0_i32 = arith.constant 0 : i32
    %c0_i32_0 = arith.constant 0 : i32
    %c0_i32_1 = arith.constant 0 : i32
    return %c0_i32, %c0_i32_0 : i32, i32
  }
  func.func @transform_2(%arg0: i32) -> (i32, i32) {
    %c0_i32 = arith.constant 0 : i32
    %c0_i32_0 = arith.constant 0 : i32
    %c0_i32_1 = arith.constant 0 : i32
    return %c0_i32, %c0_i32_0 : i32, i32
  }
  func.func @transform_3(%arg0: i32) -> (i32, i32) {
    %c0_i32 = arith.constant 0 : i32
    %c0_i32_0 = arith.constant 0 : i32
    %c0_i32_1 = arith.constant 0 : i32
    return %c0_i32, %c0_i32_0 : i32, i32
  }
  func.func @transform_4(%arg0: i32) -> (i32, i32) {
    %c0_i32 = arith.constant 0 : i32
    %c0_i32_0 = arith.constant 0 : i32
    %c0_i32_1 = arith.constant 0 : i32
    return %c0_i32, %c0_i32_0 : i32, i32
  }
  func.func @transform_5(%arg0: i32) -> (i32, i32) {
    %c0_i32 = arith.constant 0 : i32
    %c0_i32_0 = arith.constant 0 : i32
    %c0_i32_1 = arith.constant 0 : i32
    return %c0_i32, %c0_i32_0 : i32, i32
  }
  func.func @transform_6(%arg0: i32) -> (i32, i32) {
    %c0_i32 = arith.constant 0 : i32
    %c0_i32_0 = arith.constant 0 : i32
    %c0_i32_1 = arith.constant 0 : i32
    return %c0_i32, %c0_i32_0 : i32, i32
  }
  func.func @transform_7(%arg0: i32) -> (i32, i32) {
    %c0_i32 = arith.constant 0 : i32
    %c0_i32_0 = arith.constant 0 : i32
    %c0_i32_1 = arith.constant 0 : i32
    return %c0_i32, %c0_i32_0 : i32, i32
  }
  func.func @transform_8(%arg0: i32) -> (i32, i32) {
    %c0_i32 = arith.constant 0 : i32
    %c0_i32_0 = arith.constant 0 : i32
    %c0_i32_1 = arith.constant 0 : i32
    return %c0_i32, %c0_i32_0 : i32, i32
  }
  func.func @transform_9(%arg0: i32) -> (i32, i32) {
    %c0_i32 = arith.constant 0 : i32
    %c0_i32_0 = arith.constant 0 : i32
    %c0_i32_1 = arith.constant 0 : i32
    return %c0_i32, %c0_i32_0 : i32, i32
  }
  func.func @transform_10(%arg0: i32) -> (i32, i32) {
    %c0_i32 = arith.constant 0 : i32
    %c0_i32_0 = arith.constant 0 : i32
    %c0_i32_1 = arith.constant 0 : i32
    return %c0_i32, %c0_i32_0 : i32, i32
  }
  func.func @transform_11(%arg0: i32) -> (i32, i32) {
    %c0_i32 = arith.constant 0 : i32
    %c0_i32_0 = arith.constant 0 : i32
    %c0_i32_1 = arith.constant 0 : i32
    return %c0_i32, %c0_i32_0 : i32, i32
  }
  func.func @transform_12(%arg0: i32) -> (i32, i32, i32) {
    %c0_i32 = arith.constant 0 : i32
    %c0_i32_0 = arith.constant 0 : i32
    %c0_i32_1 = arith.constant 0 : i32
    return %arg0, %c0_i32, %c0_i32_0 : i32, i32, i32
  }
}

</mosaic_0001>

<llo_original>
// kernel: lru_layer.1
$region0: #{lru_layer.1}
  #allocation0 [shape = 'u32[]', space=smem, size = 0x4, offset = 0x4, fixed_abs, tag = 'smem constant byte address 0x4 - core index']
  #allocation1 [shape = 'u32[72,128]{1,0:T(1,128)}', space=vmem, size = 0x9000, scoped, tag = 'internal scratch']
  #allocation2 [shape = 'f32[64,32]{1,0:T(8,128)}', space=vmem, size = 0x8000, scoped, tag = 'scratch operand']
  #allocation3 [shape = 'f32[64,32]{1,0:T(8,128)}', space=vmem, size = 0x8000, scoped, tag = 'scratch operand']
  #allocation4 [shape = 'f32[64,32]{1,0:T(8,128)}', space=vmem, size = 0x8000, scoped, tag = 'scratch operand']
  #allocation5 [shape = 'f32[64,32]{1,0:T(8,128)}', space=vmem, size = 0x8000, scoped, tag = 'scratch operand']
  %s0 = inlined_call_operand.vmem [shape: bf16[1,64,32], index: 0, kind: input, shape index: {}]
  %s1 = inlined_call_operand.vmem [shape: bf16[32,128], index: 1, kind: input, shape index: {}]
  %s2 = inlined_call_operand.vmem [shape: f32[1,128], index: 2, kind: input, shape index: {}]
  %s3 = inlined_call_operand.vmem [shape: f32[1,32], index: 3, kind: input, shape index: {}]
  %s4 = inlined_call_operand.vmem [shape: f32[1,32], index: 4, kind: input, shape index: {}]
  %s5 = inlined_call_operand.vmem [shape: f32[1,32], index: 5, kind: input, shape index: {}]
  %s6 = inlined_call_operand.vmem [shape: f32[1,32], index: 6, kind: input, shape index: {}]
  %s7 = inlined_call_operand.vmem [shape: f32[1,32], index: 7, kind: input, shape index: {}]
  %s8 = inlined_call_operand.vmem [shape: f32[1,32], index: 8, kind: input, shape index: {}]
  %s9 = inlined_call_operand.vmem [shape: bf16[32,32], index: 9, kind: input, shape index: {}]
  %s10 = inlined_call_operand.vmem [shape: bf16[32,32], index: 10, kind: input, shape index: {}]
  %s11 = inlined_call_operand.vmem [shape: f32[1,32], index: 11, kind: input, shape index: {}]
  %s12 = inlined_call_operand.vmem [shape: f32[1,64,32], index: 12, kind: output, shape index: {}]
  %s13 = sld [smem:[#allocation0]]
  $region58: #{lru_layer.1} parent=0
    _
  %s15 = ssub.s32 1, %s13
  %s16 = scalar_select 0, %s15, %s13
  // Predicated region
  $region2: #{lru_layer.1} parent=0 // pred_check
    _
  $region3: #{lru_layer.1} parent=0 // pred_check_branch
    %18 = sbr.rel (0) target = $region5
  $region4: #{lru_layer.1} parent=0 // pred_region
    _
  $region5: #{lru_layer.1} parent=0 // pred_fallthru
    _
  // Predicated region
  $region6: #{lru_layer.1} parent=0 // pred_check
    _
  $region7: #{lru_layer.1} parent=0 // pred_check_branch
    %20 = sbr.rel (0) target = $region9
  $region8: #{lru_layer.1} parent=0 // pred_region
    _
  $region9: #{lru_layer.1} parent=0 // pred_fallthru
    _
  // Predicated region
  $region10: #{lru_layer.1} parent=0 // pred_check
    _
  $region11: #{lru_layer.1} parent=0 // pred_check_branch
    %22 = sbr.rel (0) target = $region13
  $region12: #{lru_layer.1} parent=0 // pred_region
    _
  $region13: #{lru_layer.1} parent=0 // pred_fallthru
    _
  // Predicated region
  $region14: #{lru_layer.1} parent=0 // pred_check
    _
  $region15: #{lru_layer.1} parent=0 // pred_check_branch
    %24 = sbr.rel (0) target = $region17
  $region16: #{lru_layer.1} parent=0 // pred_region
    _
  $region17: #{lru_layer.1} parent=0 // pred_fallthru
    _
  // Predicated region
  $region18: #{lru_layer.1} parent=0 // pred_check
    _
  $region19: #{lru_layer.1} parent=0 // pred_check_branch
    %26 = sbr.rel (0) target = $region21
  $region20: #{lru_layer.1} parent=0 // pred_region
    _
  $region21: #{lru_layer.1} parent=0 // pred_fallthru
    _
  // Predicated region
  $region22: #{lru_layer.1} parent=0 // pred_check
    _
  $region23: #{lru_layer.1} parent=0 // pred_check_branch
    %28 = sbr.rel (0) target = $region25
  $region24: #{lru_layer.1} parent=0 // pred_region
    _
  $region25: #{lru_layer.1} parent=0 // pred_fallthru
    _
  // Predicated region
  $region26: #{lru_layer.1} parent=0 // pred_check
    _
  $region27: #{lru_layer.1} parent=0 // pred_check_branch
    %30 = sbr.rel (0) target = $region29
  $region28: #{lru_layer.1} parent=0 // pred_region
    _
  $region29: #{lru_layer.1} parent=0 // pred_fallthru
    _
  // Predicated region
  $region30: #{lru_layer.1} parent=0 // pred_check
    _
  $region31: #{lru_layer.1} parent=0 // pred_check_branch
    %32 = sbr.rel (0) target = $region33
  $region32: #{lru_layer.1} parent=0 // pred_region
    _
  $region33: #{lru_layer.1} parent=0 // pred_fallthru
    _
  // Predicated region
  $region34: #{lru_layer.1} parent=0 // pred_check
    _
  $region35: #{lru_layer.1} parent=0 // pred_check_branch
    %34 = sbr.rel (0) target = $region37
  $region36: #{lru_layer.1} parent=0 // pred_region
    _
  $region37: #{lru_layer.1} parent=0 // pred_fallthru
    _
  // Predicated region
  $region38: #{lru_layer.1} parent=0 // pred_check
    _
  $region39: #{lru_layer.1} parent=0 // pred_check_branch
    %36 = sbr.rel (0) target = $region41
  $region40: #{lru_layer.1} parent=0 // pred_region
    _
  $region41: #{lru_layer.1} parent=0 // pred_fallthru
    _
  // Predicated region
  $region42: #{lru_layer.1} parent=0 // pred_check
    _
  $region43: #{lru_layer.1} parent=0 // pred_check_branch
    %38 = sbr.rel (0) target = $region45
  $region44: #{lru_layer.1} parent=0 // pred_region
    _
  $region45: #{lru_layer.1} parent=0 // pred_fallthru
    _
  // Predicated region
  $region46: #{lru_layer.1} parent=0 // pred_check
    _
  $region47: #{lru_layer.1} parent=0 // pred_check_branch
    %40 = sbr.rel (0) target = $region49
  $region48: #{lru_layer.1} parent=0 // pred_region
    _
  $region49: #{lru_layer.1} parent=0 // pred_fallthru
    _
  %v42 = vld [vmem:[%s0] sm:$0xf]
  %v43 = vld [vmem:[%s0 + $0x4] sm:$0xf]
  %v44 = vld [vmem:[%s0 + $0x8] sm:$0xf]
  %v45 = vld [vmem:[%s0 + $0xc] sm:$0xf]
  %v46 = vld [vmem:[%s0 + $0x10] sm:$0xf]
  %v47 = vld [vmem:[%s0 + $0x14] sm:$0xf]
  %v48 = vld [vmem:[%s0 + $0x18] sm:$0xf]
  %v49 = vld [vmem:[%s0 + $0x1c] sm:$0xf]
  %v50 = vld [vmem:[%s1] sm:$0xf]
  %v51 = vld [vmem:[%s1 + $0x4] sm:$0xf]
  %v52 = vld [vmem:[%s1 + $0x8] sm:$0xf]
  %v53 = vld [vmem:[%s1 + $0xc] sm:$0xf]
  %v54 = vld [vmem:[%s2] sm:$0x1]
  %v56 = vperm.slane %v54, 0
  %v66 = vunpack.c.l.b16 %v42
  %v67 = vunpack.c.l.b16 %v43
  %v68 = vunpack.c.l.b16 %v44
  %v69 = vunpack.c.l.b16 %v45
  %v70 = vunpack.c.l.b16 %v46
  %v71 = vunpack.c.l.b16 %v47
  %v72 = vunpack.c.l.b16 %v48
  %v73 = vunpack.c.l.b16 %v49
  %v74 = vpack.c.b16 %v67, %v66
  %v75 = vpack.c.b16 %v69, %v68
  %v76 = vpack.c.b16 %v71, %v70
  %v77 = vpack.c.b16 %v73, %v72
  %v82 = vunpack.c.l.b16 %v50
  %v83 = vunpack.c.l.b16 %v51
  %v84 = vunpack.c.l.b16 %v52
  %v85 = vunpack.c.l.b16 %v53
  %v86 = vpack.c.b16 %v83, %v82
  %v87 = vpack.c.b16 %v85, %v84
  %vm90 = vcmask 261120
  %v92 = vsel %vm90, %v74, 0
  %v95 = vsel %vm90, %v75, 0
  %v98 = vsel %vm90, %v76, 0
  %v101 = vsel %vm90, %v77, 0
  %103 = vmatpush.bf16.msra.mxu0 0
  %104 = vmatpush.bf16.msra.mxu0 0
  %105 = vmatpush.bf16.msra.mxu0 0
  %106 = vmatpush.bf16.msra.mxu0 0
  %107 = vmatpush.bf16.msra.mxu0 0
  %108 = vmatpush.bf16.msra.mxu0 0
  %109 = vmatpush.bf16.msra.mxu0 %v87
  %110 = vmatpush.bf16.msra.mxu0 %v86
  %111 = vmatmul.bf16.gmra.mxu0 %v92
  %v112 = vpop.f32.mrf.mxu0
  %v113 = vadd.f32 %v56, %v112
  %v114 = vpop.f32.mrf.mxu0
  %v115 = vadd.f32 %v56, %v114
  %116 = vmatmul.bf16.gmra.mxu0 %v95
  %v117 = vpop.f32.mrf.mxu0
  %v118 = vadd.f32 %v56, %v117
  %v119 = vpop.f32.mrf.mxu0
  %v120 = vadd.f32 %v56, %v119
  %121 = vmatmul.bf16.gmra.mxu0 %v98
  %v122 = vpop.f32.mrf.mxu0
  %v123 = vadd.f32 %v56, %v122
  %v124 = vpop.f32.mrf.mxu0
  %v125 = vadd.f32 %v56, %v124
  %126 = vmatmul.bf16.gmra.mxu0 %v101
  %v127 = vpop.f32.mrf.mxu0
  %v128 = vadd.f32 %v56, %v127
  %v129 = vpop.f32.mrf.mxu0
  %v130 = vadd.f32 %v56, %v129
  %131 = vdwg.mxu0
  %132 = vst.msk [vmem:[#allocation2] sm:$0xff] %vm90, %v113
  %133 = vst.msk [vmem:[#allocation2 + $0x8] sm:$0xff] %vm90, %v115
  %134 = vst.msk [vmem:[#allocation2 + $0x10] sm:$0xff] %vm90, %v118
  %135 = vst.msk [vmem:[#allocation2 + $0x18] sm:$0xff] %vm90, %v120
  %136 = vst.msk [vmem:[#allocation2 + $0x20] sm:$0xff] %vm90, %v123
  %137 = vst.msk [vmem:[#allocation2 + $0x28] sm:$0xff] %vm90, %v125
  %138 = vst.msk [vmem:[#allocation2 + $0x30] sm:$0xff] %vm90, %v128
  %139 = vst.msk [vmem:[#allocation2 + $0x38] sm:$0xff] %vm90, %v130
  %148 = vrot.lane.b32.xlu0 %v113, 96
  %v149 = vpop.permute.xlu0 %148
  %150 = vrot.lane.b32.xlu0 %v115, 96
  %v151 = vpop.permute.xlu0 %150
  %152 = vrot.lane.b32.xlu0 %v118, 96
  %v153 = vpop.permute.xlu0 %152
  %154 = vrot.lane.b32.xlu0 %v120, 96
  %v155 = vpop.permute.xlu0 %154
  %156 = vrot.lane.b32.xlu0 %v123, 96
  %v157 = vpop.permute.xlu0 %156
  %158 = vrot.lane.b32.xlu0 %v125, 96
  %v159 = vpop.permute.xlu0 %158
  %160 = vrot.lane.b32.xlu0 %v128, 96
  %v161 = vpop.permute.xlu0 %160
  %162 = vrot.lane.b32.xlu0 %v130, 96
  %v163 = vpop.permute.xlu0 %162
  %172 = vst.msk [vmem:[#allocation3] sm:$0xff] %vm90, %v149
  %173 = vst.msk [vmem:[#allocation3 + $0x8] sm:$0xff] %vm90, %v151
  %174 = vst.msk [vmem:[#allocation3 + $0x10] sm:$0xff] %vm90, %v153
  %175 = vst.msk [vmem:[#allocation3 + $0x18] sm:$0xff] %vm90, %v155
  %176 = vst.msk [vmem:[#allocation3 + $0x20] sm:$0xff] %vm90, %v157
  %177 = vst.msk [vmem:[#allocation3 + $0x28] sm:$0xff] %vm90, %v159
  %178 = vst.msk [vmem:[#allocation3 + $0x30] sm:$0xff] %vm90, %v161
  %179 = vst.msk [vmem:[#allocation3 + $0x38] sm:$0xff] %vm90, %v163
  %180 = vrot.lane.b32.xlu0 %v113, 64
  %v181 = vpop.permute.xlu0 %180
  %182 = vrot.lane.b32.xlu0 %v115, 64
  %v183 = vpop.permute.xlu0 %182
  %184 = vrot.lane.b32.xlu0 %v118, 64
  %v185 = vpop.permute.xlu0 %184
  %186 = vrot.lane.b32.xlu0 %v120, 64
  %v187 = vpop.permute.xlu0 %186
  %188 = vrot.lane.b32.xlu0 %v123, 64
  %v189 = vpop.permute.xlu0 %188
  %190 = vrot.lane.b32.xlu0 %v125, 64
  %v191 = vpop.permute.xlu0 %190
  %192 = vrot.lane.b32.xlu0 %v128, 64
  %v193 = vpop.permute.xlu0 %192
  %194 = vrot.lane.b32.xlu0 %v130, 64
  %v195 = vpop.permute.xlu0 %194
  %204 = vst.msk [vmem:[#allocation4] sm:$0xff] %vm90, %v181
  %205 = vst.msk [vmem:[#allocation4 + $0x8] sm:$0xff] %vm90, %v183
  %206 = vst.msk [vmem:[#allocation4 + $0x10] sm:$0xff] %vm90, %v185
  %207 = vst.msk [vmem:[#allocation4 + $0x18] sm:$0xff] %vm90, %v187
  %208 = vst.msk [vmem:[#allocation4 + $0x20] sm:$0xff] %vm90, %v189
  %209 = vst.msk [vmem:[#allocation4 + $0x28] sm:$0xff] %vm90, %v191
  %210 = vst.msk [vmem:[#allocation4 + $0x30] sm:$0xff] %vm90, %v193
  %211 = vst.msk [vmem:[#allocation4 + $0x38] sm:$0xff] %vm90, %v195
  %212 = vrot.lane.b32.xlu0 %v113, 32
  %v213 = vpop.permute.xlu0 %212
  %214 = vrot.lane.b32.xlu0 %v115, 32
  %v215 = vpop.permute.xlu0 %214
  %216 = vrot.lane.b32.xlu0 %v118, 32
  %v217 = vpop.permute.xlu0 %216
  %218 = vrot.lane.b32.xlu0 %v120, 32
  %v219 = vpop.permute.xlu0 %218
  %220 = vrot.lane.b32.xlu0 %v123, 32
  %v221 = vpop.permute.xlu0 %220
  %222 = vrot.lane.b32.xlu0 %v125, 32
  %v223 = vpop.permute.xlu0 %222
  %224 = vrot.lane.b32.xlu0 %v128, 32
  %v225 = vpop.permute.xlu0 %224
  %226 = vrot.lane.b32.xlu0 %v130, 32
  %v227 = vpop.permute.xlu0 %226
  %236 = vst.msk [vmem:[#allocation5] sm:$0xff] %vm90, %v213
  %237 = vst.msk [vmem:[#allocation5 + $0x8] sm:$0xff] %vm90, %v215
  %238 = vst.msk [vmem:[#allocation5 + $0x10] sm:$0xff] %vm90, %v217
  %239 = vst.msk [vmem:[#allocation5 + $0x18] sm:$0xff] %vm90, %v219
  %240 = vst.msk [vmem:[#allocation5 + $0x20] sm:$0xff] %vm90, %v221
  %241 = vst.msk [vmem:[#allocation5 + $0x28] sm:$0xff] %vm90, %v223
  %242 = vst.msk [vmem:[#allocation5 + $0x30] sm:$0xff] %vm90, %v225
  %243 = vst.msk [vmem:[#allocation5 + $0x38] sm:$0xff] %vm90, %v227
  %v244 = vld [vmem:[%s3] sm:$0x1]
  %v246 = vperm.slane %v244, 0
  %v248 = vld [vmem:[%s4] sm:$0x1]
  %v250 = vperm.slane %v248, 0
  %v252 = vmul.f32 %v246, 0.0
  %v253 = vmul.f32 %v250, 0.0
  %v254 = vsub.f32 %v252, %v253
  %v255 = vld [vmem:[#allocation2] sm:$0xff]
  %v256 = vadd.f32 %v254, %v255
  %v257 = vadd.f32 %v252, %v253
  %v258 = vld [vmem:[#allocation3] sm:$0xff]
  %v259 = vadd.f32 %v257, %v258
  %v260 = vld [vmem:[#allocation4] sm:$0xff]
  %v261 = vld [vmem:[#allocation5] sm:$0xff]
  %v262 = vxor.u32 %v260, 2147483648
  %v263 = vmul.f32 %v262, 1.442695
  %v264 = vpow.pop %v263
  %v265 = vadd.f32 %v264, 1.0
  %v266 = vrcp.pop %v265
  %v267 = vmul.f32 %v265, %v266
  %v268 = vsub.f32 1.0, %v267
  %v269 = vmul.f32 %v266, %v268
  %v270 = vadd.f32 %v266, %v269
  %vm271 = vweird.f32 %v265
  %vm272 = vweird.f32 %v266
  %vm273 = vmor %vm271, %vm272
  %v274 = vsel %vm273, %v266, %v270
  %v275 = vand.u32 2147483647, %v265
  %vm276 = vcmp.eq.f32.partialorder %v275, 8.507059e+37
  %v277 = vand.u32 %v265, 2147483648
  %v278 = vor.u32 1.1754944e-38, %v277
  %v279 = vsel %vm276, %v278, %v274
  %v280 = vmul.f32 1.0, %v279
  %v281 = vmul.f32 %v260, %v280
  %v282 = vmul.f32 %v256, %v281
  %283 = vst.msk [vmem:[#allocation2] sm:$0xff] %vm90, %v282
  %v284 = vxor.u32 %v261, 2147483648
  %v285 = vmul.f32 %v284, 1.442695
  %v286 = vpow.pop %v285
  %v287 = vadd.f32 %v286, 1.0
  %v288 = vrcp.pop %v287
  %v289 = vmul.f32 %v287, %v288
  %v290 = vsub.f32 1.0, %v289
  %v291 = vmul.f32 %v288, %v290
  %v292 = vadd.f32 %v288, %v291
  %vm293 = vweird.f32 %v287
  %vm294 = vweird.f32 %v288
  %vm295 = vmor %vm293, %vm294
  %v296 = vsel %vm295, %v288, %v292
  %v297 = vand.u32 2147483647, %v287
  %vm298 = vcmp.eq.f32.partialorder %v297, 8.507059e+37
  %v299 = vand.u32 %v287, 2147483648
  %v300 = vor.u32 1.1754944e-38, %v299
  %v301 = vsel %vm298, %v300, %v296
  %v302 = vmul.f32 1.0, %v301
  %v303 = vmul.f32 %v261, %v302
  %v304 = vmul.f32 %v259, %v303
  %305 = vst.msk [vmem:[#allocation3] sm:$0xff] %vm90, %v304
  %v306 = vmul.f32 %v246, %v256
  %v307 = vmul.f32 %v250, %v259
  %v308 = vsub.f32 %v306, %v307
  %s309 = scalar_lea.vmem [#allocation2], 8
  %v310 = vld [vmem:[%s309] sm:$0xff]
  %v311 = vadd.f32 %v308, %v310
  %v312 = vmul.f32 %v246, %v259
  %v313 = vmul.f32 %v250, %v256
  %v314 = vadd.f32 %v312, %v313
  %s315 = scalar_lea.vmem [#allocation3], 8
  %v316 = vld [vmem:[%s315] sm:$0xff]
  %v317 = vadd.f32 %v314, %v316
  %s318 = scalar_lea.vmem [#allocation4], 8
  %v319 = vld [vmem:[%s318] sm:$0xff]
  %s320 = scalar_lea.vmem [#allocation5], 8
  %v321 = vld [vmem:[%s320] sm:$0xff]
  %v322 = vxor.u32 %v319, 2147483648
  %v323 = vmul.f32 %v322, 1.442695
  %v324 = vpow.pop %v323
  %v325 = vadd.f32 %v324, 1.0
  %v326 = vrcp.pop %v325
  %v327 = vmul.f32 %v325, %v326
  %v328 = vsub.f32 1.0, %v327
  %v329 = vmul.f32 %v326, %v328
  %v330 = vadd.f32 %v326, %v329
  %vm331 = vweird.f32 %v325
  %vm332 = vweird.f32 %v326
  %vm333 = vmor %vm331, %vm332
  %v334 = vsel %vm333, %v326, %v330
  %v335 = vand.u32 2147483647, %v325
  %vm336 = vcmp.eq.f32.partialorder %v335, 8.507059e+37
  %v337 = vand.u32 %v325, 2147483648
  %v338 = vor.u32 1.1754944e-38, %v337
  %v339 = vsel %vm336, %v338, %v334
  %v340 = vmul.f32 1.0, %v339
  %v341 = vmul.f32 %v319, %v340
  %v342 = vmul.f32 %v311, %v341
  %343 = vst.msk [vmem:[%s309] sm:$0xff] %vm90, %v342
  %v344 = vxor.u32 %v321, 2147483648
  %v345 = vmul.f32 %v344, 1.442695
  %v346 = vpow.pop %v345
  %v347 = vadd.f32 %v346, 1.0
  %v348 = vrcp.pop %v347
  %v349 = vmul.f32 %v347, %v348
  %v350 = vsub.f32 1.0, %v349
  %v351 = vmul.f32 %v348, %v350
  %v352 = vadd.f32 %v348, %v351
  %vm353 = vweird.f32 %v347
  %vm354 = vweird.f32 %v348
  %vm355 = vmor %vm353, %vm354
  %v356 = vsel %vm355, %v348, %v352
  %v357 = vand.u32 2147483647, %v347
  %vm358 = vcmp.eq.f32.partialorder %v357, 8.507059e+37
  %v359 = vand.u32 %v347, 2147483648
  %v360 = vor.u32 1.1754944e-38, %v359
  %v361 = vsel %vm358, %v360, %v356
  %v362 = vmul.f32 1.0, %v361
  %v363 = vmul.f32 %v321, %v362
  %v364 = vmul.f32 %v317, %v363
  %365 = vst.msk [vmem:[%s315] sm:$0xff] %vm90, %v364
  %v366 = vmul.f32 %v246, %v311
  %v367 = vmul.f32 %v250, %v317
  %v368 = vsub.f32 %v366, %v367
  %s369 = scalar_lea.vmem [#allocation2], 16
  %v370 = vld [vmem:[%s369] sm:$0xff]
  %v371 = vadd.f32 %v368, %v370
  %v372 = vmul.f32 %v246, %v317
  %v373 = vmul.f32 %v250, %v311
  %v374 = vadd.f32 %v372, %v373
  %s375 = scalar_lea.vmem [#allocation3], 16
  %v376 = vld [vmem:[%s375] sm:$0xff]
  %v377 = vadd.f32 %v374, %v376
  %s378 = scalar_lea.vmem [#allocation4], 16
  %v379 = vld [vmem:[%s378] sm:$0xff]
  %s380 = scalar_lea.vmem [#allocation5], 16
  %v381 = vld [vmem:[%s380] sm:$0xff]
  %v382 = vxor.u32 %v379, 2147483648
  %v383 = vmul.f32 %v382, 1.442695
  %v384 = vpow.pop %v383
  %v385 = vadd.f32 %v384, 1.0
  %v386 = vrcp.pop %v385
  %v387 = vmul.f32 %v385, %v386
  %v388 = vsub.f32 1.0, %v387
  %v389 = vmul.f32 %v386, %v388
  %v390 = vadd.f32 %v386, %v389
  %vm391 = vweird.f32 %v385
  %vm392 = vweird.f32 %v386
  %vm393 = vmor %vm391, %vm392
  %v394 = vsel %vm393, %v386, %v390
  %v395 = vand.u32 2147483647, %v385
  %vm396 = vcmp.eq.f32.partialorder %v395, 8.507059e+37
  %v397 = vand.u32 %v385, 2147483648
  %v398 = vor.u32 1.1754944e-38, %v397
  %v399 = vsel %vm396, %v398, %v394
  %v400 = vmul.f32 1.0, %v399
  %v401 = vmul.f32 %v379, %v400
  %v402 = vmul.f32 %v371, %v401
  %403 = vst.msk [vmem:[%s369] sm:$0xff] %vm90, %v402
  %v404 = vxor.u32 %v381, 2147483648
  %v405 = vmul.f32 %v404, 1.442695
  %v406 = vpow.pop %v405
  %v407 = vadd.f32 %v406, 1.0
  %v408 = vrcp.pop %v407
  %v409 = vmul.f32 %v407, %v408
  %v410 = vsub.f32 1.0, %v409
  %v411 = vmul.f32 %v408, %v410
  %v412 = vadd.f32 %v408, %v411
  %vm413 = vweird.f32 %v407
  %vm414 = vweird.f32 %v408
  %vm415 = vmor %vm413, %vm414
  %v416 = vsel %vm415, %v408, %v412
  %v417 = vand.u32 2147483647, %v407
  %vm418 = vcmp.eq.f32.partialorder %v417, 8.507059e+37
  %v419 = vand.u32 %v407, 2147483648
  %v420 = vor.u32 1.1754944e-38, %v419
  %v421 = vsel %vm418, %v420, %v416
  %v422 = vmul.f32 1.0, %v421
  %v423 = vmul.f32 %v381, %v422
  %v424 = vmul.f32 %v377, %v423
  %425 = vst.msk [vmem:[%s375] sm:$0xff] %vm90, %v424
  %v426 = vmul.f32 %v246, %v371
  %v427 = vmul.f32 %v250, %v377
  %v428 = vsub.f32 %v426, %v427
  %s429 = scalar_lea.vmem [#allocation2], 24
  %v430 = vld [vmem:[%s429] sm:$0xff]
  %v431 = vadd.f32 %v428, %v430
  %v432 = vmul.f32 %v246, %v377
  %v433 = vmul.f32 %v250, %v371
  %v434 = vadd.f32 %v432, %v433
  %s435 = scalar_lea.vmem [#allocation3], 24
  %v436 = vld [vmem:[%s435] sm:$0xff]
  %v437 = vadd.f32 %v434, %v436
  %s438 = scalar_lea.vmem [#allocation4], 24
  %v439 = vld [vmem:[%s438] sm:$0xff]
  %s440 = scalar_lea.vmem [#allocation5], 24
  %v441 = vld [vmem:[%s440] sm:$0xff]
  %v442 = vxor.u32 %v439, 2147483648
  %v443 = vmul.f32 %v442, 1.442695
  %v444 = vpow.pop %v443
  %v445 = vadd.f32 %v444, 1.0
  %v446 = vrcp.pop %v445
  %v447 = vmul.f32 %v445, %v446
  %v448 = vsub.f32 1.0, %v447
  %v449 = vmul.f32 %v446, %v448
  %v450 = vadd.f32 %v446, %v449
  %vm451 = vweird.f32 %v445
  %vm452 = vweird.f32 %v446
  %vm453 = vmor %vm451, %vm452
  %v454 = vsel %vm453, %v446, %v450
  %v455 = vand.u32 2147483647, %v445
  %vm456 = vcmp.eq.f32.partialorder %v455, 8.507059e+37
  %v457 = vand.u32 %v445, 2147483648
  %v458 = vor.u32 1.1754944e-38, %v457
  %v459 = vsel %vm456, %v458, %v454
  %v460 = vmul.f32 1.0, %v459
  %v461 = vmul.f32 %v439, %v460
  %v462 = vmul.f32 %v431, %v461
  %463 = vst.msk [vmem:[%s429] sm:$0xff] %vm90, %v462
  %v464 = vxor.u32 %v441, 2147483648
  %v465 = vmul.f32 %v464, 1.442695
  %v466 = vpow.pop %v465
  %v467 = vadd.f32 %v466, 1.0
  %v468 = vrcp.pop %v467
  %v469 = vmul.f32 %v467, %v468
  %v470 = vsub.f32 1.0, %v469
  %v471 = vmul.f32 %v468, %v470
  %v472 = vadd.f32 %v468, %v471
  %vm473 = vweird.f32 %v467
  %vm474 = vweird.f32 %v468
  %vm475 = vmor %vm473, %vm474
  %v476 = vsel %vm475, %v468, %v472
  %v477 = vand.u32 2147483647, %v467
  %vm478 = vcmp.eq.f32.partialorder %v477, 8.507059e+37
  %v479 = vand.u32 %v467, 2147483648
  %v480 = vor.u32 1.1754944e-38, %v479
  %v481 = vsel %vm478, %v480, %v476
  %v482 = vmul.f32 1.0, %v481
  %v483 = vmul.f32 %v441, %v482
  %v484 = vmul.f32 %v437, %v483
  %485 = vst.msk [vmem:[%s435] sm:$0xff] %vm90, %v484
  %v486 = vmul.f32 %v246, %v431
  %v487 = vmul.f32 %v250, %v437
  %v488 = vsub.f32 %v486, %v487
  %s489 = scalar_lea.vmem [#allocation2], 32
  %v490 = vld [vmem:[%s489] sm:$0xff]
  %v491 = vadd.f32 %v488, %v490
  %v492 = vmul.f32 %v246, %v437
  %v493 = vmul.f32 %v250, %v431
  %v494 = vadd.f32 %v492, %v493
  %s495 = scalar_lea.vmem [#allocation3], 32
  %v496 = vld [vmem:[%s495] sm:$0xff]
  %v497 = vadd.f32 %v494, %v496
  %s498 = scalar_lea.vmem [#allocation4], 32
  %v499 = vld [vmem:[%s498] sm:$0xff]
  %s500 = scalar_lea.vmem [#allocation5], 32
  %v501 = vld [vmem:[%s500] sm:$0xff]
  %v502 = vxor.u32 %v499, 2147483648
  %v503 = vmul.f32 %v502, 1.442695
  %v504 = vpow.pop %v503
  %v505 = vadd.f32 %v504, 1.0
  %v506 = vrcp.pop %v505
  %v507 = vmul.f32 %v505, %v506
  %v508 = vsub.f32 1.0, %v507
  %v509 = vmul.f32 %v506, %v508
  %v510 = vadd.f32 %v506, %v509
  %vm511 = vweird.f32 %v505
  %vm512 = vweird.f32 %v506
  %vm513 = vmor %vm511, %vm512
  %v514 = vsel %vm513, %v506, %v510
  %v515 = vand.u32 2147483647, %v505
  %vm516 = vcmp.eq.f32.partialorder %v515, 8.507059e+37
  %v517 = vand.u32 %v505, 2147483648
  %v518 = vor.u32 1.1754944e-38, %v517
  %v519 = vsel %vm516, %v518, %v514
  %v520 = vmul.f32 1.0, %v519
  %v521 = vmul.f32 %v499, %v520
  %v522 = vmul.f32 %v491, %v521
  %523 = vst.msk [vmem:[%s489] sm:$0xff] %vm90, %v522
  %v524 = vxor.u32 %v501, 2147483648
  %v525 = vmul.f32 %v524, 1.442695
  %v526 = vpow.pop %v525
  %v527 = vadd.f32 %v526, 1.0
  %v528 = vrcp.pop %v527
  %v529 = vmul.f32 %v527, %v528
  %v530 = vsub.f32 1.0, %v529
  %v531 = vmul.f32 %v528, %v530
  %v532 = vadd.f32 %v528, %v531
  %vm533 = vweird.f32 %v527
  %vm534 = vweird.f32 %v528
  %vm535 = vmor %vm533, %vm534
  %v536 = vsel %vm535, %v528, %v532
  %v537 = vand.u32 2147483647, %v527
  %vm538 = vcmp.eq.f32.partialorder %v537, 8.507059e+37
  %v539 = vand.u32 %v527, 2147483648
  %v540 = vor.u32 1.1754944e-38, %v539
  %v541 = vsel %vm538, %v540, %v536
  %v542 = vmul.f32 1.0, %v541
  %v543 = vmul.f32 %v501, %v542
  %v544 = vmul.f32 %v497, %v543
  %545 = vst.msk [vmem:[%s495] sm:$0xff] %vm90, %v544
  %v546 = vmul.f32 %v246, %v491
  %v547 = vmul.f32 %v250, %v497
  %v548 = vsub.f32 %v546, %v547
  %s549 = scalar_lea.vmem [#allocation2], 40
  %v550 = vld [vmem:[%s549] sm:$0xff]
  %v551 = vadd.f32 %v548, %v550
  %v552 = vmul.f32 %v246, %v497
  %v553 = vmul.f32 %v250, %v491
  %v554 = vadd.f32 %v552, %v553
  %s555 = scalar_lea.vmem [#allocation3], 40
  %v556 = vld [vmem:[%s555] sm:$0xff]
  %v557 = vadd.f32 %v554, %v556
  %s558 = scalar_lea.vmem [#allocation4], 40
  %v559 = vld [vmem:[%s558] sm:$0xff]
  %s560 = scalar_lea.vmem [#allocation5], 40
  %v561 = vld [vmem:[%s560] sm:$0xff]
  %v562 = vxor.u32 %v559, 2147483648
  %v563 = vmul.f32 %v562, 1.442695
  %v564 = vpow.pop %v563
  %v565 = vadd.f32 %v564, 1.0
  %v566 = vrcp.pop %v565
  %v567 = vmul.f32 %v565, %v566
  %v568 = vsub.f32 1.0, %v567
  %v569 = vmul.f32 %v566, %v568
  %v570 = vadd.f32 %v566, %v569
  %vm571 = vweird.f32 %v565
  %vm572 = vweird.f32 %v566
  %vm573 = vmor %vm571, %vm572
  %v574 = vsel %vm573, %v566, %v570
  %v575 = vand.u32 2147483647, %v565
  %vm576 = vcmp.eq.f32.partialorder %v575, 8.507059e+37
  %v577 = vand.u32 %v565, 2147483648
  %v578 = vor.u32 1.1754944e-38, %v577
  %v579 = vsel %vm576, %v578, %v574
  %v580 = vmul.f32 1.0, %v579
  %v581 = vmul.f32 %v559, %v580
  %v582 = vmul.f32 %v551, %v581
  %583 = vst.msk [vmem:[%s549] sm:$0xff] %vm90, %v582
  %v584 = vxor.u32 %v561, 2147483648
  %v585 = vmul.f32 %v584, 1.442695
  %v586 = vpow.pop %v585
  %v587 = vadd.f32 %v586, 1.0
  %v588 = vrcp.pop %v587
  %v589 = vmul.f32 %v587, %v588
  %v590 = vsub.f32 1.0, %v589
  %v591 = vmul.f32 %v588, %v590
  %v592 = vadd.f32 %v588, %v591
  %vm593 = vweird.f32 %v587
  %vm594 = vweird.f32 %v588
  %vm595 = vmor %vm593, %vm594
  %v596 = vsel %vm595, %v588, %v592
  %v597 = vand.u32 2147483647, %v587
  %vm598 = vcmp.eq.f32.partialorder %v597, 8.507059e+37
  %v599 = vand.u32 %v587, 2147483648
  %v600 = vor.u32 1.1754944e-38, %v599
  %v601 = vsel %vm598, %v600, %v596
  %v602 = vmul.f32 1.0, %v601
  %v603 = vmul.f32 %v561, %v602
  %v604 = vmul.f32 %v557, %v603
  %605 = vst.msk [vmem:[%s555] sm:$0xff] %vm90, %v604
  %v606 = vmul.f32 %v246, %v551
  %v607 = vmul.f32 %v250, %v557
  %v608 = vsub.f32 %v606, %v607
  %s609 = scalar_lea.vmem [#allocation2], 48
  %v610 = vld [vmem:[%s609] sm:$0xff]
  %v611 = vadd.f32 %v608, %v610
  %v612 = vmul.f32 %v246, %v557
  %v613 = vmul.f32 %v250, %v551
  %v614 = vadd.f32 %v612, %v613
  %s615 = scalar_lea.vmem [#allocation3], 48
  %v616 = vld [vmem:[%s615] sm:$0xff]
  %v617 = vadd.f32 %v614, %v616
  %s618 = scalar_lea.vmem [#allocation4], 48
  %v619 = vld [vmem:[%s618] sm:$0xff]
  %s620 = scalar_lea.vmem [#allocation5], 48
  %v621 = vld [vmem:[%s620] sm:$0xff]
  %v622 = vxor.u32 %v619, 2147483648
  %v623 = vmul.f32 %v622, 1.442695
  %v624 = vpow.pop %v623
  %v625 = vadd.f32 %v624, 1.0
  %v626 = vrcp.pop %v625
  %v627 = vmul.f32 %v625, %v626
  %v628 = vsub.f32 1.0, %v627
  %v629 = vmul.f32 %v626, %v628
  %v630 = vadd.f32 %v626, %v629
  %vm631 = vweird.f32 %v625
  %vm632 = vweird.f32 %v626
  %vm633 = vmor %vm631, %vm632
  %v634 = vsel %vm633, %v626, %v630
  %v635 = vand.u32 2147483647, %v625
  %vm636 = vcmp.eq.f32.partialorder %v635, 8.507059e+37
  %v637 = vand.u32 %v625, 2147483648
  %v638 = vor.u32 1.1754944e-38, %v637
  %v639 = vsel %vm636, %v638, %v634
  %v640 = vmul.f32 1.0, %v639
  %v641 = vmul.f32 %v619, %v640
  %v642 = vmul.f32 %v611, %v641
  %643 = vst.msk [vmem:[%s609] sm:$0xff] %vm90, %v642
  %v644 = vxor.u32 %v621, 2147483648
  %v645 = vmul.f32 %v644, 1.442695
  %v646 = vpow.pop %v645
  %v647 = vadd.f32 %v646, 1.0
  %v648 = vrcp.pop %v647
  %v649 = vmul.f32 %v647, %v648
  %v650 = vsub.f32 1.0, %v649
  %v651 = vmul.f32 %v648, %v650
  %v652 = vadd.f32 %v648, %v651
  %vm653 = vweird.f32 %v647
  %vm654 = vweird.f32 %v648
  %vm655 = vmor %vm653, %vm654
  %v656 = vsel %vm655, %v648, %v652
  %v657 = vand.u32 2147483647, %v647
  %vm658 = vcmp.eq.f32.partialorder %v657, 8.507059e+37
  %v659 = vand.u32 %v647, 2147483648
  %v660 = vor.u32 1.1754944e-38, %v659
  %v661 = vsel %vm658, %v660, %v656
  %v662 = vmul.f32 1.0, %v661
  %v663 = vmul.f32 %v621, %v662
  %v664 = vmul.f32 %v617, %v663
  %665 = vst.msk [vmem:[%s615] sm:$0xff] %vm90, %v664
  %v666 = vmul.f32 %v246, %v611
  %v667 = vmul.f32 %v250, %v617
  %v668 = vsub.f32 %v666, %v667
  %s669 = scalar_lea.vmem [#allocation2], 56
  %v670 = vld [vmem:[%s669] sm:$0xff]
  %v671 = vadd.f32 %v668, %v670
  %v672 = vmul.f32 %v246, %v617
  %v673 = vmul.f32 %v250, %v611
  %v674 = vadd.f32 %v672, %v673
  %s675 = scalar_lea.vmem [#allocation3], 56
  %v676 = vld [vmem:[%s675] sm:$0xff]
  %v677 = vadd.f32 %v674, %v676
  %s678 = scalar_lea.vmem [#allocation4], 56
  %v679 = vld [vmem:[%s678] sm:$0xff]
  %s680 = scalar_lea.vmem [#allocation5], 56
  %v681 = vld [vmem:[%s680] sm:$0xff]
  %v682 = vxor.u32 %v679, 2147483648
  %v683 = vmul.f32 %v682, 1.442695
  %v684 = vpow.pop %v683
  %v685 = vadd.f32 %v684, 1.0
  %v686 = vrcp.pop %v685
  %v687 = vmul.f32 %v685, %v686
  %v688 = vsub.f32 1.0, %v687
  %v689 = vmul.f32 %v686, %v688
  %v690 = vadd.f32 %v686, %v689
  %vm691 = vweird.f32 %v685
  %vm692 = vweird.f32 %v686
  %vm693 = vmor %vm691, %vm692
  %v694 = vsel %vm693, %v686, %v690
  %v695 = vand.u32 2147483647, %v685
  %vm696 = vcmp.eq.f32.partialorder %v695, 8.507059e+37
  %v697 = vand.u32 %v685, 2147483648
  %v698 = vor.u32 1.1754944e-38, %v697
  %v699 = vsel %vm696, %v698, %v694
  %v700 = vmul.f32 1.0, %v699
  %v701 = vmul.f32 %v679, %v700
  %v702 = vmul.f32 %v671, %v701
  %703 = vst.msk [vmem:[%s669] sm:$0xff] %vm90, %v702
  %v704 = vxor.u32 %v681, 2147483648
  %v705 = vmul.f32 %v704, 1.442695
  %v706 = vpow.pop %v705
  %v707 = vadd.f32 %v706, 1.0
  %v708 = vrcp.pop %v707
  %v709 = vmul.f32 %v707, %v708
  %v710 = vsub.f32 1.0, %v709
  %v711 = vmul.f32 %v708, %v710
  %v712 = vadd.f32 %v708, %v711
  %vm713 = vweird.f32 %v707
  %vm714 = vweird.f32 %v708
  %vm715 = vmor %vm713, %vm714
  %v716 = vsel %vm715, %v708, %v712
  %v717 = vand.u32 2147483647, %v707
  %vm718 = vcmp.eq.f32.partialorder %v717, 8.507059e+37
  %v719 = vand.u32 %v707, 2147483648
  %v720 = vor.u32 1.1754944e-38, %v719
  %v721 = vsel %vm718, %v720, %v716
  %v722 = vmul.f32 1.0, %v721
  %v723 = vmul.f32 %v681, %v722
  %v724 = vmul.f32 %v677, %v723
  %725 = vst.msk [vmem:[%s675] sm:$0xff] %vm90, %v724
  %v726 = vld [vmem:[#allocation2] sm:$0xff]
  %v727 = vld [vmem:[#allocation2 + $0x8] sm:$0xff]
  %v728 = vld [vmem:[#allocation2 + $0x10] sm:$0xff]
  %v729 = vld [vmem:[#allocation2 + $0x18] sm:$0xff]
  %v730 = vld [vmem:[#allocation2 + $0x20] sm:$0xff]
  %v731 = vld [vmem:[#allocation2 + $0x28] sm:$0xff]
  %v732 = vld [vmem:[#allocation2 + $0x30] sm:$0xff]
  %v733 = vld [vmem:[#allocation2 + $0x38] sm:$0xff]
  %v734 = vld [vmem:[#allocation3] sm:$0xff]
  %v735 = vld [vmem:[#allocation3 + $0x8] sm:$0xff]
  %v736 = vld [vmem:[#allocation3 + $0x10] sm:$0xff]
  %v737 = vld [vmem:[#allocation3 + $0x18] sm:$0xff]
  %v738 = vld [vmem:[#allocation3 + $0x20] sm:$0xff]
  %v739 = vld [vmem:[#allocation3 + $0x28] sm:$0xff]
  %v740 = vld [vmem:[#allocation3 + $0x30] sm:$0xff]
  %v741 = vld [vmem:[#allocation3 + $0x38] sm:$0xff]
  %v742 = vsel %vm90, %v726, 0.0
  %743 = vadd.xlane.f32.xlu0 %v742
  %v744 = vpop.xlane.xlu0 %743
  %v745 = vsel %vm90, %v727, 0.0
  %746 = vadd.xlane.f32.xlu0 %v745
  %v747 = vpop.xlane.xlu0 %746
  %v748 = vsel %vm90, %v728, 0.0
  %749 = vadd.xlane.f32.xlu0 %v748
  %v750 = vpop.xlane.xlu0 %749
  %v751 = vsel %vm90, %v729, 0.0
  %752 = vadd.xlane.f32.xlu0 %v751
  %v753 = vpop.xlane.xlu0 %752
  %v754 = vsel %vm90, %v730, 0.0
  %755 = vadd.xlane.f32.xlu0 %v754
  %v756 = vpop.xlane.xlu0 %755
  %v757 = vsel %vm90, %v731, 0.0
  %758 = vadd.xlane.f32.xlu0 %v757
  %v759 = vpop.xlane.xlu0 %758
  %v760 = vsel %vm90, %v732, 0.0
  %761 = vadd.xlane.f32.xlu0 %v760
  %v762 = vpop.xlane.xlu0 %761
  %v763 = vsel %vm90, %v733, 0.0
  %764 = vadd.xlane.f32.xlu0 %v763
  %v765 = vpop.xlane.xlu0 %764
  %v766 = vsel %vm90, %v734, 0.0
  %767 = vadd.xlane.f32.xlu0 %v766
  %v768 = vpop.xlane.xlu0 %767
  %v769 = vsel %vm90, %v735, 0.0
  %770 = vadd.xlane.f32.xlu0 %v769
  %v771 = vpop.xlane.xlu0 %770
  %v772 = vsel %vm90, %v736, 0.0
  %773 = vadd.xlane.f32.xlu0 %v772
  %v774 = vpop.xlane.xlu0 %773
  %v775 = vsel %vm90, %v737, 0.0
  %776 = vadd.xlane.f32.xlu0 %v775
  %v777 = vpop.xlane.xlu0 %776
  %v778 = vsel %vm90, %v738, 0.0
  %779 = vadd.xlane.f32.xlu0 %v778
  %v780 = vpop.xlane.xlu0 %779
  %v781 = vsel %vm90, %v739, 0.0
  %782 = vadd.xlane.f32.xlu0 %v781
  %v783 = vpop.xlane.xlu0 %782
  %v784 = vsel %vm90, %v740, 0.0
  %785 = vadd.xlane.f32.xlu0 %v784
  %v786 = vpop.xlane.xlu0 %785
  %v787 = vsel %vm90, %v741, 0.0
  %788 = vadd.xlane.f32.xlu0 %v787
  %v789 = vpop.xlane.xlu0 %788
  %v790 = vadd.f32 %v744, %v768
  %v791 = vadd.f32 %v747, %v771
  %v792 = vadd.f32 %v750, %v774
  %v793 = vadd.f32 %v753, %v777
  %v794 = vadd.f32 %v756, %v780
  %v795 = vadd.f32 %v759, %v783
  %v796 = vadd.f32 %v762, %v786
  %v797 = vadd.f32 %v765, %v789
  %v798 = vmul.f32 %v726, %v726
  %v799 = vmul.f32 %v727, %v727
  %v800 = vmul.f32 %v728, %v728
  %v801 = vmul.f32 %v729, %v729
  %v802 = vmul.f32 %v730, %v730
  %v803 = vmul.f32 %v731, %v731
  %v804 = vmul.f32 %v732, %v732
  %v805 = vmul.f32 %v733, %v733
  %v806 = vsel %vm90, %v798, 0.0
  %807 = vadd.xlane.f32.xlu0 %v806
  %v808 = vpop.xlane.xlu0 %807
  %v809 = vsel %vm90, %v799, 0.0
  %810 = vadd.xlane.f32.xlu0 %v809
  %v811 = vpop.xlane.xlu0 %810
  %v812 = vsel %vm90, %v800, 0.0
  %813 = vadd.xlane.f32.xlu0 %v812
  %v814 = vpop.xlane.xlu0 %813
  %v815 = vsel %vm90, %v801, 0.0
  %816 = vadd.xlane.f32.xlu0 %v815
  %v817 = vpop.xlane.xlu0 %816
  %v818 = vsel %vm90, %v802, 0.0
  %819 = vadd.xlane.f32.xlu0 %v818
  %v820 = vpop.xlane.xlu0 %819
  %v821 = vsel %vm90, %v803, 0.0
  %822 = vadd.xlane.f32.xlu0 %v821
  %v823 = vpop.xlane.xlu0 %822
  %v824 = vsel %vm90, %v804, 0.0
  %825 = vadd.xlane.f32.xlu0 %v824
  %v826 = vpop.xlane.xlu0 %825
  %v827 = vsel %vm90, %v805, 0.0
  %828 = vadd.xlane.f32.xlu0 %v827
  %v829 = vpop.xlane.xlu0 %828
  %v830 = vmul.f32 %v734, %v734
  %v831 = vmul.f32 %v735, %v735
  %v832 = vmul.f32 %v736, %v736
  %v833 = vmul.f32 %v737, %v737
  %v834 = vmul.f32 %v738, %v738
  %v835 = vmul.f32 %v739, %v739
  %v836 = vmul.f32 %v740, %v740
  %v837 = vmul.f32 %v741, %v741
  %v838 = vsel %vm90, %v830, 0.0
  %839 = vadd.xlane.f32.xlu0 %v838
  %v840 = vpop.xlane.xlu0 %839
  %v841 = vsel %vm90, %v831, 0.0
  %842 = vadd.xlane.f32.xlu0 %v841
  %v843 = vpop.xlane.xlu0 %842
  %v844 = vsel %vm90, %v832, 0.0
  %845 = vadd.xlane.f32.xlu0 %v844
  %v846 = vpop.xlane.xlu0 %845
  %v847 = vsel %vm90, %v833, 0.0
  %848 = vadd.xlane.f32.xlu0 %v847
  %v849 = vpop.xlane.xlu0 %848
  %v850 = vsel %vm90, %v834, 0.0
  %851 = vadd.xlane.f32.xlu0 %v850
  %v852 = vpop.xlane.xlu0 %851
  %v853 = vsel %vm90, %v835, 0.0
  %854 = vadd.xlane.f32.xlu0 %v853
  %v855 = vpop.xlane.xlu0 %854
  %v856 = vsel %vm90, %v836, 0.0
  %857 = vadd.xlane.f32.xlu0 %v856
  %v858 = vpop.xlane.xlu0 %857
  %v859 = vsel %vm90, %v837, 0.0
  %860 = vadd.xlane.f32.xlu0 %v859
  %v861 = vpop.xlane.xlu0 %860
  %v862 = vadd.f32 %v808, %v840
  %v863 = vadd.f32 %v811, %v843
  %v864 = vadd.f32 %v814, %v846
  %v865 = vadd.f32 %v817, %v849
  %v866 = vadd.f32 %v820, %v852
  %v867 = vadd.f32 %v823, %v855
  %v868 = vadd.f32 %v826, %v858
  %v869 = vadd.f32 %v829, %v861
  %v870 = vmul.f32 %v790, 0.015625
  %v871 = vmul.f32 %v791, 0.015625
  %v872 = vmul.f32 %v792, 0.015625
  %v873 = vmul.f32 %v793, 0.015625
  %v874 = vmul.f32 %v794, 0.015625
  %v875 = vmul.f32 %v795, 0.015625
  %v876 = vmul.f32 %v796, 0.015625
  %v877 = vmul.f32 %v797, 0.015625
  %v878 = vmul.f32 %v862, 0.015625
  %v879 = vmul.f32 %v863, 0.015625
  %v880 = vmul.f32 %v864, 0.015625
  %v881 = vmul.f32 %v865, 0.015625
  %v882 = vmul.f32 %v866, 0.015625
  %v883 = vmul.f32 %v867, 0.015625
  %v884 = vmul.f32 %v868, 0.015625
  %v885 = vmul.f32 %v869, 0.015625
  %v886 = vmul.f32 %v870, %v870
  %v887 = vmul.f32 %v871, %v871
  %v888 = vmul.f32 %v872, %v872
  %v889 = vmul.f32 %v873, %v873
  %v890 = vmul.f32 %v874, %v874
  %v891 = vmul.f32 %v875, %v875
  %v892 = vmul.f32 %v876, %v876
  %v893 = vmul.f32 %v877, %v877
  %v894 = vsub.f32 %v878, %v886
  %v895 = vsub.f32 %v879, %v887
  %v896 = vsub.f32 %v880, %v888
  %v897 = vsub.f32 %v881, %v889
  %v898 = vsub.f32 %v882, %v890
  %v899 = vsub.f32 %v883, %v891
  %v900 = vsub.f32 %v884, %v892
  %v901 = vsub.f32 %v885, %v893
  %v902 = vadd.f32 %v894, 1e-05
  %v903 = vadd.f32 %v895, 1e-05
  %v904 = vadd.f32 %v896, 1e-05
  %v905 = vadd.f32 %v897, 1e-05
  %v906 = vadd.f32 %v898, 1e-05
  %v907 = vadd.f32 %v899, 1e-05
  %v908 = vadd.f32 %v900, 1e-05
  %v909 = vadd.f32 %v901, 1e-05
  %v910 = vrsqrt.pop %v902
  %v911 = vmul.f32 %v910, %v902
  %v912 = vmul.f32 %v911, %v910
  %v913 = vmul.f32 0.5, %v912
  %v914 = vsub.f32 1.5, %v913
  %v915 = vmul.f32 %v910, %v914
  %vm916 = vweird.f32 %v902
  %vm917 = vweird.f32 %v910
  %vm918 = vmor %vm916, %vm917
  %v919 = vsel %vm918, %v910, %v915
  %v920 = vrsqrt.pop %v903
  %v921 = vmul.f32 %v920, %v903
  %v922 = vmul.f32 %v921, %v920
  %v923 = vmul.f32 0.5, %v922
  %v924 = vsub.f32 1.5, %v923
  %v925 = vmul.f32 %v920, %v924
  %vm926 = vweird.f32 %v903
  %vm927 = vweird.f32 %v920
  %vm928 = vmor %vm926, %vm927
  %v929 = vsel %vm928, %v920, %v925
  %v930 = vrsqrt.pop %v904
  %v931 = vmul.f32 %v930, %v904
  %v932 = vmul.f32 %v931, %v930
  %v933 = vmul.f32 0.5, %v932
  %v934 = vsub.f32 1.5, %v933
  %v935 = vmul.f32 %v930, %v934
  %vm936 = vweird.f32 %v904
  %vm937 = vweird.f32 %v930
  %vm938 = vmor %vm936, %vm937
  %v939 = vsel %vm938, %v930, %v935
  %v940 = vrsqrt.pop %v905
  %v941 = vmul.f32 %v940, %v905
  %v942 = vmul.f32 %v941, %v940
  %v943 = vmul.f32 0.5, %v942
  %v944 = vsub.f32 1.5, %v943
  %v945 = vmul.f32 %v940, %v944
  %vm946 = vweird.f32 %v905
  %vm947 = vweird.f32 %v940
  %vm948 = vmor %vm946, %vm947
  %v949 = vsel %vm948, %v940, %v945
  %v950 = vrsqrt.pop %v906
  %v951 = vmul.f32 %v950, %v906
  %v952 = vmul.f32 %v951, %v950
  %v953 = vmul.f32 0.5, %v952
  %v954 = vsub.f32 1.5, %v953
  %v955 = vmul.f32 %v950, %v954
  %vm956 = vweird.f32 %v906
  %vm957 = vweird.f32 %v950
  %vm958 = vmor %vm956, %vm957
  %v959 = vsel %vm958, %v950, %v955
  %v960 = vrsqrt.pop %v907
  %v961 = vmul.f32 %v960, %v907
  %v962 = vmul.f32 %v961, %v960
  %v963 = vmul.f32 0.5, %v962
  %v964 = vsub.f32 1.5, %v963
  %v965 = vmul.f32 %v960, %v964
  %vm966 = vweird.f32 %v907
  %vm967 = vweird.f32 %v960
  %vm968 = vmor %vm966, %vm967
  %v969 = vsel %vm968, %v960, %v965
  %v970 = vrsqrt.pop %v908
  %v971 = vmul.f32 %v970, %v908
  %v972 = vmul.f32 %v971, %v970
  %v973 = vmul.f32 0.5, %v972
  %v974 = vsub.f32 1.5, %v973
  %v975 = vmul.f32 %v970, %v974
  %vm976 = vweird.f32 %v908
  %vm977 = vweird.f32 %v970
  %vm978 = vmor %vm976, %vm977
  %v979 = vsel %vm978, %v970, %v975
  %v980 = vrsqrt.pop %v909
  %v981 = vmul.f32 %v980, %v909
  %v982 = vmul.f32 %v981, %v980
  %v983 = vmul.f32 0.5, %v982
  %v984 = vsub.f32 1.5, %v983
  %v985 = vmul.f32 %v980, %v984
  %vm986 = vweird.f32 %v909
  %vm987 = vweird.f32 %v980
  %vm988 = vmor %vm986, %vm987
  %v989 = vsel %vm988, %v980, %v985
  %v990 = vsub.f32 %v726, %v870
  %v991 = vsub.f32 %v727, %v871
  %v992 = vsub.f32 %v728, %v872
  %v993 = vsub.f32 %v729, %v873
  %v994 = vsub.f32 %v730, %v874
  %v995 = vsub.f32 %v731, %v875
  %v996 = vsub.f32 %v732, %v876
  %v997 = vsub.f32 %v733, %v877
  %v998 = vmul.f32 %v990, %v919
  %v999 = vmul.f32 %v991, %v929
  %v1000 = vmul.f32 %v992, %v939
  %v1001 = vmul.f32 %v993, %v949
  %v1002 = vmul.f32 %v994, %v959
  %v1003 = vmul.f32 %v995, %v969
  %v1004 = vmul.f32 %v996, %v979
  %v1005 = vmul.f32 %v997, %v989
  %v1006 = vld [vmem:[%s5] sm:$0x1]
  %v1008 = vperm.slane %v1006, 0
  %v1010 = vmul.f32 %v998, %v1008
  %v1011 = vmul.f32 %v999, %v1008
  %v1012 = vmul.f32 %v1000, %v1008
  %v1013 = vmul.f32 %v1001, %v1008
  %v1014 = vmul.f32 %v1002, %v1008
  %v1015 = vmul.f32 %v1003, %v1008
  %v1016 = vmul.f32 %v1004, %v1008
  %v1017 = vmul.f32 %v1005, %v1008
  %v1018 = vld [vmem:[%s7] sm:$0x1]
  %v1020 = vperm.slane %v1018, 0
  %v1022 = vadd.f32 %v1010, %v1020
  %v1023 = vadd.f32 %v1011, %v1020
  %v1024 = vadd.f32 %v1012, %v1020
  %v1025 = vadd.f32 %v1013, %v1020
  %v1026 = vadd.f32 %v1014, %v1020
  %v1027 = vadd.f32 %v1015, %v1020
  %v1028 = vadd.f32 %v1016, %v1020
  %v1029 = vadd.f32 %v1017, %v1020
  %v1030 = vsub.f32 %v734, %v870
  %v1031 = vsub.f32 %v735, %v871
  %v1032 = vsub.f32 %v736, %v872
  %v1033 = vsub.f32 %v737, %v873
  %v1034 = vsub.f32 %v738, %v874
  %v1035 = vsub.f32 %v739, %v875
  %v1036 = vsub.f32 %v740, %v876
  %v1037 = vsub.f32 %v741, %v877
  %v1038 = vmul.f32 %v1030, %v919
  %v1039 = vmul.f32 %v1031, %v929
  %v1040 = vmul.f32 %v1032, %v939
  %v1041 = vmul.f32 %v1033, %v949
  %v1042 = vmul.f32 %v1034, %v959
  %v1043 = vmul.f32 %v1035, %v969
  %v1044 = vmul.f32 %v1036, %v979
  %v1045 = vmul.f32 %v1037, %v989
  %v1046 = vld [vmem:[%s6] sm:$0x1]
  %v1048 = vperm.slane %v1046, 0
  %v1050 = vmul.f32 %v1038, %v1048
  %v1051 = vmul.f32 %v1039, %v1048
  %v1052 = vmul.f32 %v1040, %v1048
  %v1053 = vmul.f32 %v1041, %v1048
  %v1054 = vmul.f32 %v1042, %v1048
  %v1055 = vmul.f32 %v1043, %v1048
  %v1056 = vmul.f32 %v1044, %v1048
  %v1057 = vmul.f32 %v1045, %v1048
  %v1058 = vld [vmem:[%s8] sm:$0x1]
  %v1060 = vperm.slane %v1058, 0
  %v1062 = vadd.f32 %v1050, %v1060
  %v1063 = vadd.f32 %v1051, %v1060
  %v1064 = vadd.f32 %v1052, %v1060
  %v1065 = vadd.f32 %v1053, %v1060
  %v1066 = vadd.f32 %v1054, %v1060
  %v1067 = vadd.f32 %v1055, %v1060
  %v1068 = vadd.f32 %v1056, %v1060
  %v1069 = vadd.f32 %v1057, %v1060
  %v1070 = vpack.c.bf16 %v1023, %v1022
  %v1071 = vpack.c.bf16 %v1025, %v1024
  %v1072 = vpack.c.bf16 %v1027, %v1026
  %v1073 = vpack.c.bf16 %v1029, %v1028
  %v1074 = vld [vmem:[%s9] sm:$0xf]
  %v1075 = vld [vmem:[%s9 + $0x4] sm:$0xf]
  %v1076 = vld [vmem:[%s9 + $0x8] sm:$0xf]
  %v1077 = vld [vmem:[%s9 + $0xc] sm:$0xf]
  %v1078 = vpack.c.bf16 %v1063, %v1062
  %v1079 = vpack.c.bf16 %v1065, %v1064
  %v1080 = vpack.c.bf16 %v1067, %v1066
  %v1081 = vpack.c.bf16 %v1069, %v1068
  %v1082 = vld [vmem:[%s10] sm:$0xf]
  %v1083 = vld [vmem:[%s10 + $0x4] sm:$0xf]
  %v1084 = vld [vmem:[%s10 + $0x8] sm:$0xf]
  %v1085 = vld [vmem:[%s10 + $0xc] sm:$0xf]
  %v1090 = vunpack.c.l.b16 %v1082
  %v1091 = vunpack.c.l.b16 %v1083
  %v1092 = vunpack.c.l.b16 %v1084
  %v1093 = vunpack.c.l.b16 %v1085
  %v1094 = vpack.c.b16 %v1091, %v1090
  %v1095 = vpack.c.b16 %v1093, %v1092
  %v1099 = vsel %vm90, %v1078, 0
  %v1102 = vsel %vm90, %v1079, 0
  %v1105 = vsel %vm90, %v1080, 0
  %v1108 = vsel %vm90, %v1081, 0
  %1110 = vmatpush.bf16.msra.mxu0 0
  %1111 = vmatpush.bf16.msra.mxu0 0
  %1112 = vmatpush.bf16.msra.mxu0 0
  %1113 = vmatpush.bf16.msra.mxu0 0
  %1114 = vmatpush.bf16.msra.mxu0 0
  %1115 = vmatpush.bf16.msra.mxu0 0
  %1116 = vmatpush.bf16.msra.mxu0 %v1095
  %1117 = vmatpush.bf16.msra.mxu0 %v1094
  %1118 = vmatmul.bf16.gmra.mxu0 %v1099
  %v1119 = vpop.f32.mrf.mxu0
  %v1120 = vadd.f32 0.0, %v1119
  %v1121 = vpop.f32.mrf.mxu0
  %v1122 = vadd.f32 0.0, %v1121
  %1123 = vmatmul.bf16.gmra.mxu0 %v1102
  %v1124 = vpop.f32.mrf.mxu0
  %v1125 = vadd.f32 0.0, %v1124
  %v1126 = vpop.f32.mrf.mxu0
  %v1127 = vadd.f32 0.0, %v1126
  %1128 = vmatmul.bf16.gmra.mxu0 %v1105
  %v1129 = vpop.f32.mrf.mxu0
  %v1130 = vadd.f32 0.0, %v1129
  %v1131 = vpop.f32.mrf.mxu0
  %v1132 = vadd.f32 0.0, %v1131
  %1133 = vmatmul.bf16.gmra.mxu0 %v1108
  %v1134 = vpop.f32.mrf.mxu0
  %v1135 = vadd.f32 0.0, %v1134
  %v1136 = vpop.f32.mrf.mxu0
  %v1137 = vadd.f32 0.0, %v1136
  %1138 = vdwg.mxu0
  %v1143 = vunpack.c.l.b16 %v1074
  %v1144 = vunpack.c.l.b16 %v1075
  %v1145 = vunpack.c.l.b16 %v1076
  %v1146 = vunpack.c.l.b16 %v1077
  %v1147 = vpack.c.b16 %v1144, %v1143
  %v1148 = vpack.c.b16 %v1146, %v1145
  %v1152 = vsel %vm90, %v1070, 0
  %v1155 = vsel %vm90, %v1071, 0
  %v1158 = vsel %vm90, %v1072, 0
  %v1161 = vsel %vm90, %v1073, 0
  %1163 = vmatpush.bf16.msra.mxu0 0
  %1164 = vmatpush.bf16.msra.mxu0 0
  %1165 = vmatpush.bf16.msra.mxu0 0
  %1166 = vmatpush.bf16.msra.mxu0 0
  %1167 = vmatpush.bf16.msra.mxu0 0
  %1168 = vmatpush.bf16.msra.mxu0 0
  %1169 = vmatpush.bf16.msra.mxu0 %v1148
  %1170 = vmatpush.bf16.msra.mxu0 %v1147
  %1171 = vmatmul.bf16.gmra.mxu0 %v1152
  %v1172 = vpop.f32.mrf.mxu0
  %v1173 = vadd.f32 %v1120, %v1172
  %v1174 = vpop.f32.mrf.mxu0
  %v1175 = vadd.f32 %v1122, %v1174
  %1176 = vmatmul.bf16.gmra.mxu0 %v1155
  %v1177 = vpop.f32.mrf.mxu0
  %v1178 = vadd.f32 %v1125, %v1177
  %v1179 = vpop.f32.mrf.mxu0
  %v1180 = vadd.f32 %v1127, %v1179
  %1181 = vmatmul.bf16.gmra.mxu0 %v1158
  %v1182 = vpop.f32.mrf.mxu0
  %v1183 = vadd.f32 %v1130, %v1182
  %v1184 = vpop.f32.mrf.mxu0
  %v1185 = vadd.f32 %v1132, %v1184
  %1186 = vmatmul.bf16.gmra.mxu0 %v1161
  %v1187 = vpop.f32.mrf.mxu0
  %v1188 = vadd.f32 %v1135, %v1187
  %v1189 = vpop.f32.mrf.mxu0
  %v1190 = vadd.f32 %v1137, %v1189
  %1191 = vdwg.mxu0
  %v1192 = vld [vmem:[%s11] sm:$0x1]
  %v1194 = vperm.slane %v1192, 0
  %v1196 = vadd.f32 %v1173, %v1194
  %v1197 = vadd.f32 %v1175, %v1194
  %v1198 = vadd.f32 %v1178, %v1194
  %v1199 = vadd.f32 %v1180, %v1194
  %v1200 = vadd.f32 %v1183, %v1194
  %v1201 = vadd.f32 %v1185, %v1194
  %v1202 = vadd.f32 %v1188, %v1194
  %v1203 = vadd.f32 %v1190, %v1194
  %1204 = vst.msk [vmem:[%s12] sm:$0xff] %vm90, %v1196
  %1205 = vst.msk [vmem:[%s12 + $0x8] sm:$0xff] %vm90, %v1197
  %1206 = vst.msk [vmem:[%s12 + $0x10] sm:$0xff] %vm90, %v1198
  %1207 = vst.msk [vmem:[%s12 + $0x18] sm:$0xff] %vm90, %v1199
  %1208 = vst.msk [vmem:[%s12 + $0x20] sm:$0xff] %vm90, %v1200
  %1209 = vst.msk [vmem:[%s12 + $0x28] sm:$0xff] %vm90, %v1201
  %1210 = vst.msk [vmem:[%s12 + $0x30] sm:$0xff] %vm90, %v1202
  %1211 = vst.msk [vmem:[%s12 + $0x38] sm:$0xff] %vm90, %v1203
  // Predicated region
  $region50: #{lru_layer.1} parent=0 // pred_check
    _
  $region51: #{lru_layer.1} parent=0 // pred_check_branch
    %1213 = sbr.rel (0) target = $region53
  $region52: #{lru_layer.1} parent=0 // pred_region
    _
  $region53: #{lru_layer.1} parent=0 // pred_fallthru
    _
  // Predicated region
  $region54: #{lru_layer.1} parent=0 // pred_check
    _
  $region55: #{lru_layer.1} parent=0 // pred_check_branch
    %1215 = sbr.rel (0) target = $region57
  $region56: #{lru_layer.1} parent=0 // pred_region
    _
  $region57: #{lru_layer.1} parent=0 // pred_fallthru
    _

</llo_original>
